<compile_context>
chip_gen: v7x
topology: tpu7x:2x2x1
jax: 0.10.0
libtpu: 0.0.40
codegen_flags: <defaults>
</compile_context>

<pallas_src>
import functools

import jax
import jax.numpy as jnp
from jax.experimental import pallas as pl
from jax.experimental.pallas import tpu as pltpu

EMB_SZ = 100      # self.emb_sz
HIDDEN_SZ = 50    # self.hidden_sz
MARGIN = 0.4
COS_EPS = 0.1     # torch.nn.CosineSimilarity(dim=2, eps=0.1)

EMB_PAD = 128     # emb dim padded to one full lane register
H_PAD = 128       # each gate gets its own 128-lane slot
GATE_DIM = 4 * H_PAD


def _rhyme_kernel(idx_ref, table_ref, w_ih_ref, w_hh_ref, b_ref, out_ref,
                  *, seq_len, bs, valid_bs):
    """Single-invocation kernel.

    idx_ref  : (seq_len*4*bs, 1)     int32  time-major packed char indices
    table_ref: (vocab_pad, EMB_PAD)  bf16   zero-padded embedding table
    w_ih_ref : (EMB_PAD, 4*H_PAD)    bf16   input->gates weights (i,f,g,o slots)
    w_hh_ref : (H_PAD, 4*H_PAD)      bf16   hidden->gates weights
    b_ref    : (1, 4*H_PAD)          f32    b_ih + b_hh (gate-slot layout)
    out_ref  : (out_rows, H_PAD)     f32    rows 0..bs-1: lanes 0..2 = cs1..cs3,
                                            lane 3 = total loss (broadcast)
    """
    B = 4 * bs
    rows = seq_len * B
    vocab_pad = table_ref.shape[0]
    out_rows = out_ref.shape[0]

    # ---- Phase 0: in-kernel embedding gather via one-hot MXU matmul ----
    # one_hot rows are exact 0/1, table is bf16, f32 accumulation -> the
    # gathered rows equal the bf16 table entries exactly.
    idx = idx_ref[...]                                              # (rows, 1)
    lane = jax.lax.broadcasted_iota(jnp.int32, (rows, vocab_pad), 1)
    one_hot = (lane == idx).astype(jnp.bfloat16)                    # (rows, vocab_pad)
    emb = jnp.dot(one_hot, table_ref[...],
                  preferred_element_type=jnp.float32)               # (rows, EMB_PAD)

    # ---- Phase 1: x->gates for ALL timesteps in one MXU matmul ----
    gates_x = jnp.dot(emb.astype(jnp.bfloat16), w_ih_ref[...],
                      preferred_element_type=jnp.float32) + b_ref[...]  # (rows, 4*H_PAD)

    w_hh = w_hh_ref[...]                                            # (H_PAD, 4*H_PAD) bf16

    h = jnp.zeros((B, H_PAD), jnp.float32)
    c = jnp.zeros((B, H_PAD), jnp.float32)

    # ---- Phase 2: recurrence (fully unrolled; only h @ W_hh per step) ----
    for t in range(seq_len):
        # B is a multiple of 8 -> sublane-aligned static slice.
        gates = gates_x[t * B:(t + 1) * B, :] + jnp.dot(
            h.astype(jnp.bfloat16), w_hh, preferred_element_type=jnp.float32)
        # PyTorch LSTM gate order: input, forget, cell(g), output.
        # Each slice is a lane-aligned 128-wide block (free vreg select).
        i_g = jax.nn.sigmoid(gates[:, 0 * H_PAD:1 * H_PAD])
        f_g = jax.nn.sigmoid(gates[:, 1 * H_PAD:2 * H_PAD])
        g_g = jnp.tanh(gates[:, 2 * H_PAD:3 * H_PAD])
        o_g = jax.nn.sigmoid(gates[:, 3 * H_PAD:4 * H_PAD])
        c = f_g * c + i_g * g_g
        h = o_g * jnp.tanh(c)
    # Padded lanes (>= HIDDEN_SZ) of h/c stay exactly 0 because their weight
    # columns/rows and bias entries are zero, so the 128-lane sums are exact.

    # ---- Phase 3: cosine sims + margin loss (runs once) ----
    # Rows [0:bs]=target, [bs:2bs]=ref1, [2bs:3bs]=ref2, [3bs:4bs]=ref3.
    t_h = h[0:bs]                                          # (bs, H_PAD)
    t_sq = jnp.sum(t_h * t_h, axis=-1, keepdims=True)      # (bs, 1)

    cs = []
    for r in range(3):
        r_h = h[(r + 1) * bs:(r + 2) * bs]                 # (bs, H_PAD)
        w12 = jnp.sum(t_h * r_h, axis=-1, keepdims=True)
        r_sq = jnp.sum(r_h * r_h, axis=-1, keepdims=True)
        # cos = w12 / max(||t||*||r||, eps) = w12 * rsqrt(max(t_sq*r_sq, eps^2))
        inv = jax.lax.rsqrt(jnp.maximum(t_sq * r_sq, COS_EPS * COS_EPS))
        cs.append(w12 * inv)                               # (bs, 1)
    cs1, cs2, cs3 = cs

    # per-sample margin loss: Q = sorted desc; max(0, margin - Q[0] + Q[1])
    mx = jnp.maximum(jnp.maximum(cs1, cs2), cs3)
    mn = jnp.minimum(jnp.minimum(cs1, cs2), cs3)
    mid = (cs1 + cs2 + cs3) - mx - mn
    per_loss = jnp.maximum(0.0, MARGIN - mx + mid)         # (bs, 1)

    # Mask batch-padding rows (added only to keep B a multiple of 8).
    if bs > valid_bs:
        row_id = jax.lax.broadcasted_iota(jnp.int32, (bs, 1), 0)
        per_loss = jnp.where(row_id < valid_bs, per_loss, 0.0)

    loss_total = jnp.sum(per_loss, axis=0, keepdims=True)  # (1, 1)

    # Single lane-dense output buffer: one unmasked store, one output DMA.
    packed = jnp.concatenate(
        [cs1, cs2, cs3,
         jnp.broadcast_to(loss_total, (bs, 1)),
         jnp.zeros((bs, H_PAD - 4), jnp.float32)], axis=1)          # (bs, 128)
    if out_rows > bs:
        packed = jnp.concatenate(
            [packed, jnp.zeros((out_rows - bs, H_PAD), jnp.float32)], axis=0)
    out_ref[...] = packed


def _pad_gate_cols(w, hidden, h_pad):
    """(rows, 4*hidden) gate blocks (i,f,g,o) -> (rows, 4*h_pad) with each gate
    in its own h_pad-wide slot, zero-padded within the slot."""
    rows = w.shape[0]
    out = jnp.zeros((rows, 4 * h_pad), w.dtype)
    for g in range(4):
        out = out.at[:, g * h_pad:g * h_pad + hidden].set(
            w[:, g * hidden:(g + 1) * hidden])
    return out


def prepare_params(emb_table, w_ih, w_hh, bias):
    """One-time parameter re-layout (hoisted out of the forward pass).

    emb_table : (vocab, EMB_SZ) f32
    w_ih      : (EMB_SZ, 4*HIDDEN_SZ) f32   NOTE: transpose of PyTorch's
    w_hh      : (HIDDEN_SZ, 4*HIDDEN_SZ) f32       weight_ih_l0 / weight_hh_l0
    bias      : (4*HIDDEN_SZ,) f32          (b_ih + b_hh)
    """
    vocab, emb_sz = emb_table.shape
    vocab_pad = ((vocab + 127) // 128) * 128
    table_p = jnp.zeros((vocab_pad, EMB_PAD), jnp.float32)
    table_p = table_p.at[:vocab, :emb_sz].set(emb_table).astype(jnp.bfloat16)

    w_ih_p = _pad_gate_cols(w_ih, HIDDEN_SZ, H_PAD)                 # (EMB, 512)
    w_ih_p = jnp.pad(
        w_ih_p, ((0, EMB_PAD - emb_sz), (0, 0))).astype(jnp.bfloat16)   # (128, 512)
    w_hh_p = _pad_gate_cols(w_hh, HIDDEN_SZ, H_PAD)                 # (HIDDEN, 512)
    w_hh_p = jnp.pad(
        w_hh_p, ((0, H_PAD - HIDDEN_SZ), (0, 0))).astype(jnp.bfloat16)  # (128, 512)
    b_p = _pad_gate_cols(bias.reshape(1, -1), HIDDEN_SZ, H_PAD).astype(jnp.float32)

    return {"table": table_p, "w_ih": w_ih_p, "w_hh": w_hh_p, "b": b_p}


def rhyme_forward(target_idx, refs_idx, params):
    """Equivalent of RhymeModel.forward.

    target_idx: (bs, seq_len) int32
    refs_idx  : (bs, 3, seq_len) int32
    params    : output of prepare_params()
    Returns (loss_scalar, (cs1, cs2, cs3)) with each cs of shape (bs,).
    """
    bs, seq_len = target_idx.shape
    # Pad bs to even so B = 4*bs_k is a multiple of 8 (sublane alignment of the
    # per-step gate slice). Padded samples are masked out of the loss in-kernel.
    bs_k = bs + (bs % 2)
    B_k = 4 * bs_k

    groups = [target_idx, refs_idx[:, 0], refs_idx[:, 1], refs_idx[:, 2]]
    if bs_k != bs:
        groups = [jnp.pad(g, ((0, bs_k - bs), (0, 0))) for g in groups]
    all_idx = jnp.concatenate(groups, axis=0)                       # (B_k, seq)
    # Time-major packing: row t*B_k + b  <->  timestep t of batch-row b.
    idx_tm = all_idx.T.reshape(seq_len * B_k, 1).astype(jnp.int32)

    out_rows = max(8, ((bs_k + 7) // 8) * 8)

    kernel = functools.partial(_rhyme_kernel,
                               seq_len=seq_len, bs=bs_k, valid_bs=bs)

    out = pl.pallas_call(
        kernel,
        out_shape=jax.ShapeDtypeStruct((out_rows, H_PAD), jnp.float32),
        grid=(1,),
        in_specs=[
            pl.BlockSpec(idx_tm.shape, lambda i: (0, 0)),
            pl.BlockSpec(params["table"].shape, lambda i: (0, 0)),
            pl.BlockSpec(params["w_ih"].shape, lambda i: (0, 0)),
            pl.BlockSpec(params["w_hh"].shape, lambda i: (0, 0)),
            pl.BlockSpec(params["b"].shape, lambda i: (0, 0)),
        ],
        out_specs=pl.BlockSpec((out_rows, H_PAD), lambda i: (0, 0)),
        compiler_params=pltpu.CompilerParams(
            dimension_semantics=("arbitrary",)),
    )(idx_tm, params["table"], params["w_ih"], params["w_hh"], params["b"])

    loss = out[0, 3]
    return loss, (out[:bs, 0], out[:bs, 1], out[:bs, 2])


if __name__ == "__main__":
    # Small, deterministic setup.  util.get_char_dicts() is replaced by a
    # synthetic char vocabulary / max word length.
    VOCAB_SZ = 30        # len(idx2char)
    SEQ_LEN = 8          # max_word_len
    BS = 2               # batch size

    key = jax.random.PRNGKey(0)
    k_emb, k_wih, k_whh, k_bih, k_bhh, k_tgt, k_ref = jax.random.split(key, 7)

    # Parameters (deterministic synthetic init; gate order i,f,g,o).
    # NOTE: PyTorch stores weight_ih/weight_hh as (4H, in); this wrapper takes
    # the transposed (in, 4H) layout.
    emb_table = jax.random.normal(k_emb, (VOCAB_SZ, EMB_SZ), jnp.float32) * 0.1
    w_ih = jax.random.normal(k_wih, (EMB_SZ, 4 * HIDDEN_SZ), jnp.float32) * 0.1
    w_hh = jax.random.normal(k_whh, (HIDDEN_SZ, 4 * HIDDEN_SZ), jnp.float32) * 0.1
    bias = (jax.random.normal(k_bih, (4 * HIDDEN_SZ,), jnp.float32) * 0.1
            + jax.random.normal(k_bhh, (4 * HIDDEN_SZ,), jnp.float32) * 0.1)

    # One-time parameter re-layout (hoisted out of the per-call path).
    params = prepare_params(emb_table, w_ih, w_hh, bias)

    # rhyme_data: (target word, [ref1, ref2, ref3]) as char-index sequences.
    target_idx = jax.random.randint(k_tgt, (BS, SEQ_LEN), 0, VOCAB_SZ, jnp.int32)
    refs_idx = jax.random.randint(k_ref, (BS, 3, SEQ_LEN), 0, VOCAB_SZ, jnp.int32)

    fwd = jax.jit(rhyme_forward)
    loss, (cs1, cs2, cs3) = fwd(target_idx, refs_idx, params)
    jax.block_until_ready((loss, cs1, cs2, cs3))
    print("KERNEL_OK")
</pallas_src>

<mosaic_0001>
module attributes {stable_mosaic.version = 11 : i64} {
  func.func @_rhyme_kernel(%arg0: i32, %arg1: memref<64x1xi32, #tpu.memory_space<vmem>>, %arg2: memref<128x128xbf16, #tpu.memory_space<vmem>>, %arg3: memref<128x512xbf16, #tpu.memory_space<vmem>>, %arg4: memref<128x512xbf16, #tpu.memory_space<vmem>>, %arg5: memref<1x512xf32, #tpu.memory_space<vmem>>, %arg6: memref<8x128xf32, #tpu.memory_space<vmem>>) attributes {dimension_semantics = [#tpu.dimension_semantics<arbitrary>], iteration_bounds = array<i64: 1>, scalar_prefetch = 0 : i64, scratch_operands = 0 : i64, tpu.core_type = #tpu.core_type<tc>, window_params = [{pipeline_mode = #tpu.pipeline_mode<synchronous>, transform_indices = @transform_0, window_bounds = array<i64: 64, 1>}, {pipeline_mode = #tpu.pipeline_mode<synchronous>, transform_indices = @transform_1, window_bounds = array<i64: 128, 128>}, {pipeline_mode = #tpu.pipeline_mode<synchronous>, transform_indices = @transform_2, window_bounds = array<i64: 128, 512>}, {pipeline_mode = #tpu.pipeline_mode<synchronous>, transform_indices = @transform_3, window_bounds = array<i64: 128, 512>}, {pipeline_mode = #tpu.pipeline_mode<synchronous>, transform_indices = @transform_4, window_bounds = array<i64: 1, 512>}, {pipeline_mode = #tpu.pipeline_mode<synchronous>, transform_indices = @transform_5, window_bounds = array<i64: 8, 128>}]} {
    %c0 = arith.constant 0 : index
    %c0_0 = arith.constant 0 : index
    %0 = vector.load %arg1[%c0, %c0_0] : memref<64x1xi32, #tpu.memory_space<vmem>>, vector<64x1xi32>
    %1 = tpu.iota {dimensions = array<i32: 1>} : vector<64x128xi32>
    %2 = vector.broadcast %0 : vector<64x1xi32> to vector<64x128xi32>
    %3 = arith.cmpi eq, %1, %2 : vector<64x128xi32>
    %4 = arith.extui %3 : vector<64x128xi1> to vector<64x128xi32>
    %5 = arith.sitofp %4 : vector<64x128xi32> to vector<64x128xf32>
    %6 = arith.truncf %5 : vector<64x128xf32> to vector<64x128xbf16>
    %c0_1 = arith.constant 0 : index
    %c0_2 = arith.constant 0 : index
    %7 = vector.load %arg2[%c0_1, %c0_2] : memref<128x128xbf16, #tpu.memory_space<vmem>>, vector<128x128xbf16>
    %cst = arith.constant dense<0.000000e+00> : vector<64x128xf32>
    %8 = tpu.matmul %6, %7, %cst {dimension_numbers = #tpu.dot_dimension_numbers<[1], [0], [0], [1], [0, 0, 1, 1], [], []>} : vector<64x128xbf16>, vector<128x128xbf16>, vector<64x128xf32> -> vector<64x128xf32>
    %9 = arith.truncf %8 : vector<64x128xf32> to vector<64x128xbf16>
    %c0_3 = arith.constant 0 : index
    %c0_4 = arith.constant 0 : index
    %10 = vector.load %arg3[%c0_3, %c0_4] : memref<128x512xbf16, #tpu.memory_space<vmem>>, vector<128x512xbf16>
    %cst_5 = arith.constant dense<0.000000e+00> : vector<64x512xf32>
    %11 = tpu.matmul %9, %10, %cst_5 {dimension_numbers = #tpu.dot_dimension_numbers<[1], [0], [0], [1], [0, 0, 1, 1], [], []>} : vector<64x128xbf16>, vector<128x512xbf16>, vector<64x512xf32> -> vector<64x512xf32>
    %c0_6 = arith.constant 0 : index
    %c0_7 = arith.constant 0 : index
    %12 = vector.load %arg5[%c0_6, %c0_7] : memref<1x512xf32, #tpu.memory_space<vmem>>, vector<1x512xf32>
    %13 = vector.broadcast %12 : vector<1x512xf32> to vector<64x512xf32>
    %14 = arith.addf %11, %13 : vector<64x512xf32>
    %c0_8 = arith.constant 0 : index
    %c0_9 = arith.constant 0 : index
    %15 = vector.load %arg4[%c0_8, %c0_9] : memref<128x512xbf16, #tpu.memory_space<vmem>>, vector<128x512xbf16>
    %cst_10 = arith.constant 0.000000e+00 : f32
    %16 = vector.broadcast %cst_10 : f32 to vector<8x128xf32>
    %cst_11 = arith.constant 0.000000e+00 : f32
    %17 = vector.broadcast %cst_11 : f32 to vector<8x128xf32>
    %18 = vector.extract_strided_slice %14 {offsets = [0, 0], sizes = [8, 512], strides = [1, 1]} : vector<64x512xf32> to vector<8x512xf32>
    %19 = arith.truncf %16 : vector<8x128xf32> to vector<8x128xbf16>
    %cst_12 = arith.constant dense<0.000000e+00> : vector<8x512xf32>
    %20 = tpu.matmul %19, %15, %cst_12 {dimension_numbers = #tpu.dot_dimension_numbers<[1], [0], [0], [1], [0, 0, 1, 1], [], []>} : vector<8x128xbf16>, vector<128x512xbf16>, vector<8x512xf32> -> vector<8x512xf32>
    %21 = arith.addf %18, %20 : vector<8x512xf32>
    %22 = vector.extract_strided_slice %21 {offsets = [0, 0], sizes = [8, 128], strides = [1, 1]} : vector<8x512xf32> to vector<8x128xf32>
    %23 = arith.negf %22 : vector<8x128xf32>
    %24 = math.exp %23 : vector<8x128xf32>
    %cst_13 = arith.constant 1.000000e+00 : f32
    %25 = vector.broadcast %cst_13 : f32 to vector<8x128xf32>
    %26 = arith.addf %25, %24 : vector<8x128xf32>
    %27 = arith.divf %25, %26 : vector<8x128xf32>
    %28 = vector.extract_strided_slice %21 {offsets = [0, 128], sizes = [8, 128], strides = [1, 1]} : vector<8x512xf32> to vector<8x128xf32>
    %29 = arith.negf %28 : vector<8x128xf32>
    %30 = math.exp %29 : vector<8x128xf32>
    %cst_14 = arith.constant 1.000000e+00 : f32
    %31 = vector.broadcast %cst_14 : f32 to vector<8x128xf32>
    %32 = arith.addf %31, %30 : vector<8x128xf32>
    %33 = arith.divf %31, %32 : vector<8x128xf32>
    %34 = vector.extract_strided_slice %21 {offsets = [0, 256], sizes = [8, 128], strides = [1, 1]} : vector<8x512xf32> to vector<8x128xf32>
    %35 = math.tanh %34 : vector<8x128xf32>
    %36 = vector.extract_strided_slice %21 {offsets = [0, 384], sizes = [8, 128], strides = [1, 1]} : vector<8x512xf32> to vector<8x128xf32>
    %37 = arith.negf %36 : vector<8x128xf32>
    %38 = math.exp %37 : vector<8x128xf32>
    %cst_15 = arith.constant 1.000000e+00 : f32
    %39 = vector.broadcast %cst_15 : f32 to vector<8x128xf32>
    %40 = arith.addf %39, %38 : vector<8x128xf32>
    %41 = arith.divf %39, %40 : vector<8x128xf32>
    %42 = arith.mulf %33, %17 : vector<8x128xf32>
    %43 = arith.mulf %27, %35 : vector<8x128xf32>
    %44 = arith.addf %42, %43 : vector<8x128xf32>
    %45 = math.tanh %44 : vector<8x128xf32>
    %46 = arith.mulf %41, %45 : vector<8x128xf32>
    %47 = vector.extract_strided_slice %14 {offsets = [8, 0], sizes = [8, 512], strides = [1, 1]} : vector<64x512xf32> to vector<8x512xf32>
    %48 = arith.truncf %46 : vector<8x128xf32> to vector<8x128xbf16>
    %cst_16 = arith.constant dense<0.000000e+00> : vector<8x512xf32>
    %49 = tpu.matmul %48, %15, %cst_16 {dimension_numbers = #tpu.dot_dimension_numbers<[1], [0], [0], [1], [0, 0, 1, 1], [], []>} : vector<8x128xbf16>, vector<128x512xbf16>, vector<8x512xf32> -> vector<8x512xf32>
    %50 = arith.addf %47, %49 : vector<8x512xf32>
    %51 = vector.extract_strided_slice %50 {offsets = [0, 0], sizes = [8, 128], strides = [1, 1]} : vector<8x512xf32> to vector<8x128xf32>
    %52 = arith.negf %51 : vector<8x128xf32>
    %53 = math.exp %52 : vector<8x128xf32>
    %cst_17 = arith.constant 1.000000e+00 : f32
    %54 = vector.broadcast %cst_17 : f32 to vector<8x128xf32>
    %55 = arith.addf %54, %53 : vector<8x128xf32>
    %56 = arith.divf %54, %55 : vector<8x128xf32>
    %57 = vector.extract_strided_slice %50 {offsets = [0, 128], sizes = [8, 128], strides = [1, 1]} : vector<8x512xf32> to vector<8x128xf32>
    %58 = arith.negf %57 : vector<8x128xf32>
    %59 = math.exp %58 : vector<8x128xf32>
    %cst_18 = arith.constant 1.000000e+00 : f32
    %60 = vector.broadcast %cst_18 : f32 to vector<8x128xf32>
    %61 = arith.addf %60, %59 : vector<8x128xf32>
    %62 = arith.divf %60, %61 : vector<8x128xf32>
    %63 = vector.extract_strided_slice %50 {offsets = [0, 256], sizes = [8, 128], strides = [1, 1]} : vector<8x512xf32> to vector<8x128xf32>
    %64 = math.tanh %63 : vector<8x128xf32>
    %65 = vector.extract_strided_slice %50 {offsets = [0, 384], sizes = [8, 128], strides = [1, 1]} : vector<8x512xf32> to vector<8x128xf32>
    %66 = arith.negf %65 : vector<8x128xf32>
    %67 = math.exp %66 : vector<8x128xf32>
    %cst_19 = arith.constant 1.000000e+00 : f32
    %68 = vector.broadcast %cst_19 : f32 to vector<8x128xf32>
    %69 = arith.addf %68, %67 : vector<8x128xf32>
    %70 = arith.divf %68, %69 : vector<8x128xf32>
    %71 = arith.mulf %62, %44 : vector<8x128xf32>
    %72 = arith.mulf %56, %64 : vector<8x128xf32>
    %73 = arith.addf %71, %72 : vector<8x128xf32>
    %74 = math.tanh %73 : vector<8x128xf32>
    %75 = arith.mulf %70, %74 : vector<8x128xf32>
    %76 = vector.extract_strided_slice %14 {offsets = [16, 0], sizes = [8, 512], strides = [1, 1]} : vector<64x512xf32> to vector<8x512xf32>
    %77 = arith.truncf %75 : vector<8x128xf32> to vector<8x128xbf16>
    %cst_20 = arith.constant dense<0.000000e+00> : vector<8x512xf32>
    %78 = tpu.matmul %77, %15, %cst_20 {dimension_numbers = #tpu.dot_dimension_numbers<[1], [0], [0], [1], [0, 0, 1, 1], [], []>} : vector<8x128xbf16>, vector<128x512xbf16>, vector<8x512xf32> -> vector<8x512xf32>
    %79 = arith.addf %76, %78 : vector<8x512xf32>
    %80 = vector.extract_strided_slice %79 {offsets = [0, 0], sizes = [8, 128], strides = [1, 1]} : vector<8x512xf32> to vector<8x128xf32>
    %81 = arith.negf %80 : vector<8x128xf32>
    %82 = math.exp %81 : vector<8x128xf32>
    %cst_21 = arith.constant 1.000000e+00 : f32
    %83 = vector.broadcast %cst_21 : f32 to vector<8x128xf32>
    %84 = arith.addf %83, %82 : vector<8x128xf32>
    %85 = arith.divf %83, %84 : vector<8x128xf32>
    %86 = vector.extract_strided_slice %79 {offsets = [0, 128], sizes = [8, 128], strides = [1, 1]} : vector<8x512xf32> to vector<8x128xf32>
    %87 = arith.negf %86 : vector<8x128xf32>
    %88 = math.exp %87 : vector<8x128xf32>
    %cst_22 = arith.constant 1.000000e+00 : f32
    %89 = vector.broadcast %cst_22 : f32 to vector<8x128xf32>
    %90 = arith.addf %89, %88 : vector<8x128xf32>
    %91 = arith.divf %89, %90 : vector<8x128xf32>
    %92 = vector.extract_strided_slice %79 {offsets = [0, 256], sizes = [8, 128], strides = [1, 1]} : vector<8x512xf32> to vector<8x128xf32>
    %93 = math.tanh %92 : vector<8x128xf32>
    %94 = vector.extract_strided_slice %79 {offsets = [0, 384], sizes = [8, 128], strides = [1, 1]} : vector<8x512xf32> to vector<8x128xf32>
    %95 = arith.negf %94 : vector<8x128xf32>
    %96 = math.exp %95 : vector<8x128xf32>
    %cst_23 = arith.constant 1.000000e+00 : f32
    %97 = vector.broadcast %cst_23 : f32 to vector<8x128xf32>
    %98 = arith.addf %97, %96 : vector<8x128xf32>
    %99 = arith.divf %97, %98 : vector<8x128xf32>
    %100 = arith.mulf %91, %73 : vector<8x128xf32>
    %101 = arith.mulf %85, %93 : vector<8x128xf32>
    %102 = arith.addf %100, %101 : vector<8x128xf32>
    %103 = math.tanh %102 : vector<8x128xf32>
    %104 = arith.mulf %99, %103 : vector<8x128xf32>
    %105 = vector.extract_strided_slice %14 {offsets = [24, 0], sizes = [8, 512], strides = [1, 1]} : vector<64x512xf32> to vector<8x512xf32>
    %106 = arith.truncf %104 : vector<8x128xf32> to vector<8x128xbf16>
    %cst_24 = arith.constant dense<0.000000e+00> : vector<8x512xf32>
    %107 = tpu.matmul %106, %15, %cst_24 {dimension_numbers = #tpu.dot_dimension_numbers<[1], [0], [0], [1], [0, 0, 1, 1], [], []>} : vector<8x128xbf16>, vector<128x512xbf16>, vector<8x512xf32> -> vector<8x512xf32>
    %108 = arith.addf %105, %107 : vector<8x512xf32>
    %109 = vector.extract_strided_slice %108 {offsets = [0, 0], sizes = [8, 128], strides = [1, 1]} : vector<8x512xf32> to vector<8x128xf32>
    %110 = arith.negf %109 : vector<8x128xf32>
    %111 = math.exp %110 : vector<8x128xf32>
    %cst_25 = arith.constant 1.000000e+00 : f32
    %112 = vector.broadcast %cst_25 : f32 to vector<8x128xf32>
    %113 = arith.addf %112, %111 : vector<8x128xf32>
    %114 = arith.divf %112, %113 : vector<8x128xf32>
    %115 = vector.extract_strided_slice %108 {offsets = [0, 128], sizes = [8, 128], strides = [1, 1]} : vector<8x512xf32> to vector<8x128xf32>
    %116 = arith.negf %115 : vector<8x128xf32>
    %117 = math.exp %116 : vector<8x128xf32>
    %cst_26 = arith.constant 1.000000e+00 : f32
    %118 = vector.broadcast %cst_26 : f32 to vector<8x128xf32>
    %119 = arith.addf %118, %117 : vector<8x128xf32>
    %120 = arith.divf %118, %119 : vector<8x128xf32>
    %121 = vector.extract_strided_slice %108 {offsets = [0, 256], sizes = [8, 128], strides = [1, 1]} : vector<8x512xf32> to vector<8x128xf32>
    %122 = math.tanh %121 : vector<8x128xf32>
    %123 = vector.extract_strided_slice %108 {offsets = [0, 384], sizes = [8, 128], strides = [1, 1]} : vector<8x512xf32> to vector<8x128xf32>
    %124 = arith.negf %123 : vector<8x128xf32>
    %125 = math.exp %124 : vector<8x128xf32>
    %cst_27 = arith.constant 1.000000e+00 : f32
    %126 = vector.broadcast %cst_27 : f32 to vector<8x128xf32>
    %127 = arith.addf %126, %125 : vector<8x128xf32>
    %128 = arith.divf %126, %127 : vector<8x128xf32>
    %129 = arith.mulf %120, %102 : vector<8x128xf32>
    %130 = arith.mulf %114, %122 : vector<8x128xf32>
    %131 = arith.addf %129, %130 : vector<8x128xf32>
    %132 = math.tanh %131 : vector<8x128xf32>
    %133 = arith.mulf %128, %132 : vector<8x128xf32>
    %134 = vector.extract_strided_slice %14 {offsets = [32, 0], sizes = [8, 512], strides = [1, 1]} : vector<64x512xf32> to vector<8x512xf32>
    %135 = arith.truncf %133 : vector<8x128xf32> to vector<8x128xbf16>
    %cst_28 = arith.constant dense<0.000000e+00> : vector<8x512xf32>
    %136 = tpu.matmul %135, %15, %cst_28 {dimension_numbers = #tpu.dot_dimension_numbers<[1], [0], [0], [1], [0, 0, 1, 1], [], []>} : vector<8x128xbf16>, vector<128x512xbf16>, vector<8x512xf32> -> vector<8x512xf32>
    %137 = arith.addf %134, %136 : vector<8x512xf32>
    %138 = vector.extract_strided_slice %137 {offsets = [0, 0], sizes = [8, 128], strides = [1, 1]} : vector<8x512xf32> to vector<8x128xf32>
    %139 = arith.negf %138 : vector<8x128xf32>
    %140 = math.exp %139 : vector<8x128xf32>
    %cst_29 = arith.constant 1.000000e+00 : f32
    %141 = vector.broadcast %cst_29 : f32 to vector<8x128xf32>
    %142 = arith.addf %141, %140 : vector<8x128xf32>
    %143 = arith.divf %141, %142 : vector<8x128xf32>
    %144 = vector.extract_strided_slice %137 {offsets = [0, 128], sizes = [8, 128], strides = [1, 1]} : vector<8x512xf32> to vector<8x128xf32>
    %145 = arith.negf %144 : vector<8x128xf32>
    %146 = math.exp %145 : vector<8x128xf32>
    %cst_30 = arith.constant 1.000000e+00 : f32
    %147 = vector.broadcast %cst_30 : f32 to vector<8x128xf32>
    %148 = arith.addf %147, %146 : vector<8x128xf32>
    %149 = arith.divf %147, %148 : vector<8x128xf32>
    %150 = vector.extract_strided_slice %137 {offsets = [0, 256], sizes = [8, 128], strides = [1, 1]} : vector<8x512xf32> to vector<8x128xf32>
    %151 = math.tanh %150 : vector<8x128xf32>
    %152 = vector.extract_strided_slice %137 {offsets = [0, 384], sizes = [8, 128], strides = [1, 1]} : vector<8x512xf32> to vector<8x128xf32>
    %153 = arith.negf %152 : vector<8x128xf32>
    %154 = math.exp %153 : vector<8x128xf32>
    %cst_31 = arith.constant 1.000000e+00 : f32
    %155 = vector.broadcast %cst_31 : f32 to vector<8x128xf32>
    %156 = arith.addf %155, %154 : vector<8x128xf32>
    %157 = arith.divf %155, %156 : vector<8x128xf32>
    %158 = arith.mulf %149, %131 : vector<8x128xf32>
    %159 = arith.mulf %143, %151 : vector<8x128xf32>
    %160 = arith.addf %158, %159 : vector<8x128xf32>
    %161 = math.tanh %160 : vector<8x128xf32>
    %162 = arith.mulf %157, %161 : vector<8x128xf32>
    %163 = vector.extract_strided_slice %14 {offsets = [40, 0], sizes = [8, 512], strides = [1, 1]} : vector<64x512xf32> to vector<8x512xf32>
    %164 = arith.truncf %162 : vector<8x128xf32> to vector<8x128xbf16>
    %cst_32 = arith.constant dense<0.000000e+00> : vector<8x512xf32>
    %165 = tpu.matmul %164, %15, %cst_32 {dimension_numbers = #tpu.dot_dimension_numbers<[1], [0], [0], [1], [0, 0, 1, 1], [], []>} : vector<8x128xbf16>, vector<128x512xbf16>, vector<8x512xf32> -> vector<8x512xf32>
    %166 = arith.addf %163, %165 : vector<8x512xf32>
    %167 = vector.extract_strided_slice %166 {offsets = [0, 0], sizes = [8, 128], strides = [1, 1]} : vector<8x512xf32> to vector<8x128xf32>
    %168 = arith.negf %167 : vector<8x128xf32>
    %169 = math.exp %168 : vector<8x128xf32>
    %cst_33 = arith.constant 1.000000e+00 : f32
    %170 = vector.broadcast %cst_33 : f32 to vector<8x128xf32>
    %171 = arith.addf %170, %169 : vector<8x128xf32>
    %172 = arith.divf %170, %171 : vector<8x128xf32>
    %173 = vector.extract_strided_slice %166 {offsets = [0, 128], sizes = [8, 128], strides = [1, 1]} : vector<8x512xf32> to vector<8x128xf32>
    %174 = arith.negf %173 : vector<8x128xf32>
    %175 = math.exp %174 : vector<8x128xf32>
    %cst_34 = arith.constant 1.000000e+00 : f32
    %176 = vector.broadcast %cst_34 : f32 to vector<8x128xf32>
    %177 = arith.addf %176, %175 : vector<8x128xf32>
    %178 = arith.divf %176, %177 : vector<8x128xf32>
    %179 = vector.extract_strided_slice %166 {offsets = [0, 256], sizes = [8, 128], strides = [1, 1]} : vector<8x512xf32> to vector<8x128xf32>
    %180 = math.tanh %179 : vector<8x128xf32>
    %181 = vector.extract_strided_slice %166 {offsets = [0, 384], sizes = [8, 128], strides = [1, 1]} : vector<8x512xf32> to vector<8x128xf32>
    %182 = arith.negf %181 : vector<8x128xf32>
    %183 = math.exp %182 : vector<8x128xf32>
    %cst_35 = arith.constant 1.000000e+00 : f32
    %184 = vector.broadcast %cst_35 : f32 to vector<8x128xf32>
    %185 = arith.addf %184, %183 : vector<8x128xf32>
    %186 = arith.divf %184, %185 : vector<8x128xf32>
    %187 = arith.mulf %178, %160 : vector<8x128xf32>
    %188 = arith.mulf %172, %180 : vector<8x128xf32>
    %189 = arith.addf %187, %188 : vector<8x128xf32>
    %190 = math.tanh %189 : vector<8x128xf32>
    %191 = arith.mulf %186, %190 : vector<8x128xf32>
    %192 = vector.extract_strided_slice %14 {offsets = [48, 0], sizes = [8, 512], strides = [1, 1]} : vector<64x512xf32> to vector<8x512xf32>
    %193 = arith.truncf %191 : vector<8x128xf32> to vector<8x128xbf16>
    %cst_36 = arith.constant dense<0.000000e+00> : vector<8x512xf32>
    %194 = tpu.matmul %193, %15, %cst_36 {dimension_numbers = #tpu.dot_dimension_numbers<[1], [0], [0], [1], [0, 0, 1, 1], [], []>} : vector<8x128xbf16>, vector<128x512xbf16>, vector<8x512xf32> -> vector<8x512xf32>
    %195 = arith.addf %192, %194 : vector<8x512xf32>
    %196 = vector.extract_strided_slice %195 {offsets = [0, 0], sizes = [8, 128], strides = [1, 1]} : vector<8x512xf32> to vector<8x128xf32>
    %197 = arith.negf %196 : vector<8x128xf32>
    %198 = math.exp %197 : vector<8x128xf32>
    %cst_37 = arith.constant 1.000000e+00 : f32
    %199 = vector.broadcast %cst_37 : f32 to vector<8x128xf32>
    %200 = arith.addf %199, %198 : vector<8x128xf32>
    %201 = arith.divf %199, %200 : vector<8x128xf32>
    %202 = vector.extract_strided_slice %195 {offsets = [0, 128], sizes = [8, 128], strides = [1, 1]} : vector<8x512xf32> to vector<8x128xf32>
    %203 = arith.negf %202 : vector<8x128xf32>
    %204 = math.exp %203 : vector<8x128xf32>
    %cst_38 = arith.constant 1.000000e+00 : f32
    %205 = vector.broadcast %cst_38 : f32 to vector<8x128xf32>
    %206 = arith.addf %205, %204 : vector<8x128xf32>
    %207 = arith.divf %205, %206 : vector<8x128xf32>
    %208 = vector.extract_strided_slice %195 {offsets = [0, 256], sizes = [8, 128], strides = [1, 1]} : vector<8x512xf32> to vector<8x128xf32>
    %209 = math.tanh %208 : vector<8x128xf32>
    %210 = vector.extract_strided_slice %195 {offsets = [0, 384], sizes = [8, 128], strides = [1, 1]} : vector<8x512xf32> to vector<8x128xf32>
    %211 = arith.negf %210 : vector<8x128xf32>
    %212 = math.exp %211 : vector<8x128xf32>
    %cst_39 = arith.constant 1.000000e+00 : f32
    %213 = vector.broadcast %cst_39 : f32 to vector<8x128xf32>
    %214 = arith.addf %213, %212 : vector<8x128xf32>
    %215 = arith.divf %213, %214 : vector<8x128xf32>
    %216 = arith.mulf %207, %189 : vector<8x128xf32>
    %217 = arith.mulf %201, %209 : vector<8x128xf32>
    %218 = arith.addf %216, %217 : vector<8x128xf32>
    %219 = math.tanh %218 : vector<8x128xf32>
    %220 = arith.mulf %215, %219 : vector<8x128xf32>
    %221 = vector.extract_strided_slice %14 {offsets = [56, 0], sizes = [8, 512], strides = [1, 1]} : vector<64x512xf32> to vector<8x512xf32>
    %222 = arith.truncf %220 : vector<8x128xf32> to vector<8x128xbf16>
    %cst_40 = arith.constant dense<0.000000e+00> : vector<8x512xf32>
    %223 = tpu.matmul %222, %15, %cst_40 {dimension_numbers = #tpu.dot_dimension_numbers<[1], [0], [0], [1], [0, 0, 1, 1], [], []>} : vector<8x128xbf16>, vector<128x512xbf16>, vector<8x512xf32> -> vector<8x512xf32>
    %224 = arith.addf %221, %223 : vector<8x512xf32>
    %225 = vector.extract_strided_slice %224 {offsets = [0, 0], sizes = [8, 128], strides = [1, 1]} : vector<8x512xf32> to vector<8x128xf32>
    %226 = arith.negf %225 : vector<8x128xf32>
    %227 = math.exp %226 : vector<8x128xf32>
    %cst_41 = arith.constant 1.000000e+00 : f32
    %228 = vector.broadcast %cst_41 : f32 to vector<8x128xf32>
    %229 = arith.addf %228, %227 : vector<8x128xf32>
    %230 = arith.divf %228, %229 : vector<8x128xf32>
    %231 = vector.extract_strided_slice %224 {offsets = [0, 128], sizes = [8, 128], strides = [1, 1]} : vector<8x512xf32> to vector<8x128xf32>
    %232 = arith.negf %231 : vector<8x128xf32>
    %233 = math.exp %232 : vector<8x128xf32>
    %cst_42 = arith.constant 1.000000e+00 : f32
    %234 = vector.broadcast %cst_42 : f32 to vector<8x128xf32>
    %235 = arith.addf %234, %233 : vector<8x128xf32>
    %236 = arith.divf %234, %235 : vector<8x128xf32>
    %237 = vector.extract_strided_slice %224 {offsets = [0, 256], sizes = [8, 128], strides = [1, 1]} : vector<8x512xf32> to vector<8x128xf32>
    %238 = math.tanh %237 : vector<8x128xf32>
    %239 = vector.extract_strided_slice %224 {offsets = [0, 384], sizes = [8, 128], strides = [1, 1]} : vector<8x512xf32> to vector<8x128xf32>
    %240 = arith.negf %239 : vector<8x128xf32>
    %241 = math.exp %240 : vector<8x128xf32>
    %cst_43 = arith.constant 1.000000e+00 : f32
    %242 = vector.broadcast %cst_43 : f32 to vector<8x128xf32>
    %243 = arith.addf %242, %241 : vector<8x128xf32>
    %244 = arith.divf %242, %243 : vector<8x128xf32>
    %245 = arith.mulf %236, %218 : vector<8x128xf32>
    %246 = arith.mulf %230, %238 : vector<8x128xf32>
    %247 = arith.addf %245, %246 : vector<8x128xf32>
    %248 = math.tanh %247 : vector<8x128xf32>
    %249 = arith.mulf %244, %248 : vector<8x128xf32>
    %250 = vector.extract_strided_slice %249 {offsets = [0, 0], sizes = [2, 128], strides = [1, 1]} : vector<8x128xf32> to vector<2x128xf32>
    %251 = arith.mulf %250, %250 : vector<2x128xf32>
    %cst_44 = arith.constant dense<0.000000e+00> : vector<2xf32>
    %252 = vector.multi_reduction <add>, %251, %cst_44 [1] : vector<2x128xf32> to vector<2xf32>
    %253 = vector.shape_cast %252 : vector<2xf32> to vector<2x1xf32>
    %254 = vector.extract_strided_slice %249 {offsets = [2, 0], sizes = [2, 128], strides = [1, 1]} : vector<8x128xf32> to vector<2x128xf32>
    %255 = arith.mulf %250, %254 : vector<2x128xf32>
    %cst_45 = arith.constant dense<0.000000e+00> : vector<2xf32>
    %256 = vector.multi_reduction <add>, %255, %cst_45 [1] : vector<2x128xf32> to vector<2xf32>
    %257 = vector.shape_cast %256 : vector<2xf32> to vector<2x1xf32>
    %258 = arith.mulf %254, %254 : vector<2x128xf32>
    %cst_46 = arith.constant dense<0.000000e+00> : vector<2xf32>
    %259 = vector.multi_reduction <add>, %258, %cst_46 [1] : vector<2x128xf32> to vector<2xf32>
    %260 = vector.shape_cast %259 : vector<2xf32> to vector<2x1xf32>
    %261 = arith.mulf %253, %260 : vector<2x1xf32>
    %cst_47 = arith.constant 0.00999999977 : f32
    %262 = vector.broadcast %cst_47 : f32 to vector<2x1xf32>
    %263 = arith.maximumf %261, %262 : vector<2x1xf32>
    %264 = math.rsqrt %263 : vector<2x1xf32>
    %265 = arith.mulf %257, %264 : vector<2x1xf32>
    %266 = vector.extract_strided_slice %249 {offsets = [4, 0], sizes = [2, 128], strides = [1, 1]} : vector<8x128xf32> to vector<2x128xf32>
    %267 = arith.mulf %250, %266 : vector<2x128xf32>
    %cst_48 = arith.constant dense<0.000000e+00> : vector<2xf32>
    %268 = vector.multi_reduction <add>, %267, %cst_48 [1] : vector<2x128xf32> to vector<2xf32>
    %269 = vector.shape_cast %268 : vector<2xf32> to vector<2x1xf32>
    %270 = arith.mulf %266, %266 : vector<2x128xf32>
    %cst_49 = arith.constant dense<0.000000e+00> : vector<2xf32>
    %271 = vector.multi_reduction <add>, %270, %cst_49 [1] : vector<2x128xf32> to vector<2xf32>
    %272 = vector.shape_cast %271 : vector<2xf32> to vector<2x1xf32>
    %273 = arith.mulf %253, %272 : vector<2x1xf32>
    %cst_50 = arith.constant 0.00999999977 : f32
    %274 = vector.broadcast %cst_50 : f32 to vector<2x1xf32>
    %275 = arith.maximumf %273, %274 : vector<2x1xf32>
    %276 = math.rsqrt %275 : vector<2x1xf32>
    %277 = arith.mulf %269, %276 : vector<2x1xf32>
    %278 = vector.extract_strided_slice %249 {offsets = [6, 0], sizes = [2, 128], strides = [1, 1]} : vector<8x128xf32> to vector<2x128xf32>
    %279 = arith.mulf %250, %278 : vector<2x128xf32>
    %cst_51 = arith.constant dense<0.000000e+00> : vector<2xf32>
    %280 = vector.multi_reduction <add>, %279, %cst_51 [1] : vector<2x128xf32> to vector<2xf32>
    %281 = vector.shape_cast %280 : vector<2xf32> to vector<2x1xf32>
    %282 = arith.mulf %278, %278 : vector<2x128xf32>
    %cst_52 = arith.constant dense<0.000000e+00> : vector<2xf32>
    %283 = vector.multi_reduction <add>, %282, %cst_52 [1] : vector<2x128xf32> to vector<2xf32>
    %284 = vector.shape_cast %283 : vector<2xf32> to vector<2x1xf32>
    %285 = arith.mulf %253, %284 : vector<2x1xf32>
    %cst_53 = arith.constant 0.00999999977 : f32
    %286 = vector.broadcast %cst_53 : f32 to vector<2x1xf32>
    %287 = arith.maximumf %285, %286 : vector<2x1xf32>
    %288 = math.rsqrt %287 : vector<2x1xf32>
    %289 = arith.mulf %281, %288 : vector<2x1xf32>
    %290 = arith.maximumf %265, %277 : vector<2x1xf32>
    %291 = arith.maximumf %290, %289 : vector<2x1xf32>
    %292 = arith.minimumf %265, %277 : vector<2x1xf32>
    %293 = arith.minimumf %292, %289 : vector<2x1xf32>
    %294 = arith.addf %265, %277 : vector<2x1xf32>
    %295 = arith.addf %294, %289 : vector<2x1xf32>
    %296 = arith.subf %295, %291 : vector<2x1xf32>
    %297 = arith.subf %296, %293 : vector<2x1xf32>
    %cst_54 = arith.constant 4.000000e-01 : f32
    %298 = vector.broadcast %cst_54 : f32 to vector<2x1xf32>
    %299 = arith.subf %298, %291 : vector<2x1xf32>
    %300 = arith.addf %299, %297 : vector<2x1xf32>
    %cst_55 = arith.constant 0.000000e+00 : f32
    %301 = vector.broadcast %cst_55 : f32 to vector<2x1xf32>
    %302 = arith.maximumf %301, %300 : vector<2x1xf32>
    %cst_56 = arith.constant dense<0.000000e+00> : vector<1xf32>
    %303 = vector.multi_reduction <add>, %302, %cst_56 [0] : vector<2x1xf32> to vector<1xf32>
    %304 = vector.shape_cast %303 : vector<1xf32> to vector<1x1xf32>
    %305 = vector.shape_cast %304 : vector<1x1xf32> to vector<1x1xf32>
    %306 = vector.broadcast %305 : vector<1x1xf32> to vector<2x1xf32>
    %cst_57 = arith.constant 0.000000e+00 : f32
    %307 = vector.broadcast %cst_57 : f32 to vector<2x124xf32>
    %308 = tpu.concatenate %265, %277, %289, %306, %307 in 1 : vector<2x1xf32>, vector<2x1xf32>, vector<2x1xf32>, vector<2x1xf32>, vector<2x124xf32> -> vector<2x128xf32>
    %cst_58 = arith.constant 0.000000e+00 : f32
    %309 = vector.broadcast %cst_58 : f32 to vector<6x128xf32>
    %310 = tpu.concatenate %308, %309 in 0 : vector<2x128xf32>, vector<6x128xf32> -> vector<8x128xf32>
    %c0_59 = arith.constant 0 : index
    %c0_60 = arith.constant 0 : index
    %311 = vector.load %arg6[%c0_59, %c0_60] : memref<8x128xf32, #tpu.memory_space<vmem>>, vector<8x128xf32>
    tpu.vector_store %arg6[%c0_59, %c0_60], %310 {strides = array<i32>} : memref<8x128xf32, #tpu.memory_space<vmem>>, vector<8x128xf32>,
    return
  }
  func.func @transform_0(%arg0: i32) -> (i32, i32) {
    %c0_i32 = arith.constant 0 : i32
    %c0_i32_0 = arith.constant 0 : i32
    %c0_i32_1 = arith.constant 0 : i32
    return %c0_i32, %c0_i32_0 : i32, i32
  }
  func.func @transform_1(%arg0: i32) -> (i32, i32) {
    %c0_i32 = arith.constant 0 : i32
    %c0_i32_0 = arith.constant 0 : i32
    %c0_i32_1 = arith.constant 0 : i32
    return %c0_i32, %c0_i32_0 : i32, i32
  }
  func.func @transform_2(%arg0: i32) -> (i32, i32) {
    %c0_i32 = arith.constant 0 : i32
    %c0_i32_0 = arith.constant 0 : i32
    %c0_i32_1 = arith.constant 0 : i32
    return %c0_i32, %c0_i32_0 : i32, i32
  }
  func.func @transform_3(%arg0: i32) -> (i32, i32) {
    %c0_i32 = arith.constant 0 : i32
    %c0_i32_0 = arith.constant 0 : i32
    %c0_i32_1 = arith.constant 0 : i32
    return %c0_i32, %c0_i32_0 : i32, i32
  }
  func.func @transform_4(%arg0: i32) -> (i32, i32) {
    %c0_i32 = arith.constant 0 : i32
    %c0_i32_0 = arith.constant 0 : i32
    %c0_i32_1 = arith.constant 0 : i32
    return %c0_i32, %c0_i32_0 : i32, i32
  }
  func.func @transform_5(%arg0: i32) -> (i32, i32) {
    %c0_i32 = arith.constant 0 : i32
    %c0_i32_0 = arith.constant 0 : i32
    %c0_i32_1 = arith.constant 0 : i32
    return %c0_i32, %c0_i32_0 : i32, i32
  }
}

</mosaic_0001>

<llo_original>
// kernel: rhyme_forward.1
$region0: #{rhyme_forward.1}
  #allocation0 [shape = 'u32[]', space=smem, size = 0x4, offset = 0x4, fixed_abs, tag = 'smem constant byte address 0x4 - core index']
  #allocation1 [shape = 'u32[144,128]{1,0:T(1,128)}', space=vmem, size = 0x12000, scoped, tag = 'internal scratch']
  %s0 = inlined_call_operand.vmem [shape: s32[64,1], index: 0, kind: input, shape index: {}]
  %s1 = inlined_call_operand.vmem [shape: bf16[128,128], index: 1, kind: input, shape index: {}]
  %s2 = inlined_call_operand.hbm [shape: bf16[128,512], index: 2, kind: input, shape index: {}]
  %s3 = inlined_call_operand.hbm [shape: bf16[128,512], index: 3, kind: input, shape index: {}]
  %s4 = inlined_call_operand.vmem [shape: f32[1,512], index: 4, kind: input, shape index: {}]
  %s5 = inlined_call_operand.vmem [shape: f32[8,128], index: 5, kind: output, shape index: {}]
  %s6 = sld [smem:[#allocation0]]
  $region38: #{rhyme_forward.1} parent=0
    _
  %s8 = ssub.s32 1, %s6
  %s9 = scalar_select 0, %s8, %s6
  $region1: #{rhyme_forward.1} parent=0
    #allocation2 [shape = 'u8[131072]{0}', space=vmem, size = 0x20000, scoped, tag = 'input window, operand 2, single buffered']
    #allocation3 [shape = 's32[1]{0}', space=sflag, size = 0x4, scoped, tag = 'scoped memory for rhyme_forward.1']
    #allocation4 [shape = 'u8[131072]{0}', space=vmem, size = 0x20000, scoped, tag = 'input window, operand 3, single buffered']
    #allocation5 [shape = 's32[1]{0}', space=sflag, size = 0x4, scoped, tag = 'scoped memory for rhyme_forward.1']
    %10 = vsyncpa [#allocation3], 0
    %11 = vsyncpa [#allocation5], 0
    // Predicated region
    $region2: #{rhyme_forward.1} parent=1 // pred_check
      _
    $region3: #{rhyme_forward.1} parent=1 // pred_check_branch
      %13 = sbr.rel (0) target = $region5
    $region4: #{rhyme_forward.1} parent=1 // pred_region
      _
    $region5: #{rhyme_forward.1} parent=1 // pred_fallthru
      _
    // Predicated region
    $region6: #{rhyme_forward.1} parent=1 // pred_check
      _
    $region7: #{rhyme_forward.1} parent=1 // pred_check_branch
      %15 = sbr.rel (0) target = $region9
    $region8: #{rhyme_forward.1} parent=1 // pred_region
      _
    $region9: #{rhyme_forward.1} parent=1 // pred_fallthru
      _
    // Predicated region
    $region10: #{rhyme_forward.1} parent=1 // pred_check
      _
    $region11: #{rhyme_forward.1} parent=1 // pred_check_branch
      %17 = sbr.rel (0) target = $region13
    $region12: #{rhyme_forward.1} parent=1 // pred_region
      %s19 = ssub.s32 4096, 4096
      %20 = vsyncadd [#allocation3], %s19
      %s21 = sshll.u32 [#allocation2], 4
      %s22 = int_to_ptr.vmem [resolvable:$true] %s21
      %27 = dma.hbm_to_vmem [thread:$0]  %s2, 4096, %s22, [#allocation3], 256, 256, 16
    $region13: #{rhyme_forward.1} parent=1 // pred_fallthru
      _
    // Predicated region
    $region14: #{rhyme_forward.1} parent=1 // pred_check
      _
    $region15: #{rhyme_forward.1} parent=1 // pred_check_branch
      %29 = sbr.rel (0) target = $region17
    $region16: #{rhyme_forward.1} parent=1 // pred_region
      %s31 = ssub.s32 4096, 4096
      %32 = vsyncadd [#allocation5], %s31
      %s33 = sshll.u32 [#allocation4], 4
      %s34 = int_to_ptr.vmem [resolvable:$true] %s33
      %39 = dma.hbm_to_vmem [thread:$0]  %s3, 4096, %s34, [#allocation5], 256, 256, 16
    $region17: #{rhyme_forward.1} parent=1 // pred_fallthru
      _
    // Predicated region
    $region18: #{rhyme_forward.1} parent=1 // pred_check
      _
    $region19: #{rhyme_forward.1} parent=1 // pred_check_branch
      %41 = sbr.rel (0) target = $region21
    $region20: #{rhyme_forward.1} parent=1 // pred_region
      _
    $region21: #{rhyme_forward.1} parent=1 // pred_fallthru
      _
    // Predicated region
    $region22: #{rhyme_forward.1} parent=1 // pred_check
      _
    $region23: #{rhyme_forward.1} parent=1 // pred_check_branch
      %43 = sbr.rel (0) target = $region25
    $region24: #{rhyme_forward.1} parent=1 // pred_region
      %44 = dma.done [#allocation3], 4096
    $region25: #{rhyme_forward.1} parent=1 // pred_fallthru
      _
    // Predicated region
    $region26: #{rhyme_forward.1} parent=1 // pred_check
      _
    $region27: #{rhyme_forward.1} parent=1 // pred_check_branch
      %46 = sbr.rel (0) target = $region29
    $region28: #{rhyme_forward.1} parent=1 // pred_region
      %47 = dma.done [#allocation5], 4096
    $region29: #{rhyme_forward.1} parent=1 // pred_fallthru
      _
    %v49 = vld [vmem:[%s0] sm:$0xff]
    %v50 = vld [vmem:[%s0 + $0x8] sm:$0xff]
    %v51 = vld [vmem:[%s0 + $0x10] sm:$0xff]
    %v52 = vld [vmem:[%s0 + $0x18] sm:$0xff]
    %v53 = vld [vmem:[%s0 + $0x20] sm:$0xff]
    %v54 = vld [vmem:[%s0 + $0x28] sm:$0xff]
    %v55 = vld [vmem:[%s0 + $0x30] sm:$0xff]
    %v56 = vld [vmem:[%s0 + $0x38] sm:$0xff]
    %v57 = vlaneseq
    %v58 = vand.u32 %v57, 127
    %59 = vset.pattern.permute.xlu0 0
    %60 = vperm.xlu0 %59, %v49
    %v61 = vpop.permute.xlu0 %60
    %62 = vset.pattern.permute.xlu0 0
    %63 = vperm.xlu0 %62, %v50
    %v64 = vpop.permute.xlu0 %63
    %65 = vset.pattern.permute.xlu0 0
    %66 = vperm.xlu0 %65, %v51
    %v67 = vpop.permute.xlu0 %66
    %68 = vset.pattern.permute.xlu0 0
    %69 = vperm.xlu0 %68, %v52
    %v70 = vpop.permute.xlu0 %69
    %71 = vset.pattern.permute.xlu0 0
    %72 = vperm.xlu0 %71, %v53
    %v73 = vpop.permute.xlu0 %72
    %74 = vset.pattern.permute.xlu0 0
    %75 = vperm.xlu0 %74, %v54
    %v76 = vpop.permute.xlu0 %75
    %77 = vset.pattern.permute.xlu0 0
    %78 = vperm.xlu0 %77, %v55
    %v79 = vpop.permute.xlu0 %78
    %80 = vset.pattern.permute.xlu0 0
    %81 = vperm.xlu0 %80, %v56
    %v82 = vpop.permute.xlu0 %81
    %vm83 = vcmp.eq.s32.totalorder %v58, %v61
    %vm84 = vcmp.eq.s32.totalorder %v58, %v64
    %vm85 = vcmp.eq.s32.totalorder %v58, %v67
    %vm86 = vcmp.eq.s32.totalorder %v58, %v70
    %vm87 = vcmp.eq.s32.totalorder %v58, %v73
    %vm88 = vcmp.eq.s32.totalorder %v58, %v76
    %vm89 = vcmp.eq.s32.totalorder %v58, %v79
    %vm90 = vcmp.eq.s32.totalorder %v58, %v82
    %v91 = vsel %vm83, 1, 0
    %v92 = vsel %vm84, 1, 0
    %v93 = vsel %vm85, 1, 0
    %v94 = vsel %vm86, 1, 0
    %v95 = vsel %vm87, 1, 0
    %v96 = vsel %vm88, 1, 0
    %v97 = vsel %vm89, 1, 0
    %v98 = vsel %vm90, 1, 0
    %v99 = vcvt.s32.f32 %v91
    %v100 = vcvt.s32.f32 %v92
    %v101 = vcvt.s32.f32 %v93
    %v102 = vcvt.s32.f32 %v94
    %v103 = vcvt.s32.f32 %v95
    %v104 = vcvt.s32.f32 %v96
    %v105 = vcvt.s32.f32 %v97
    %v106 = vcvt.s32.f32 %v98
    %v107 = vpack.c.bf16 %v100, %v99
    %v108 = vpack.c.bf16 %v102, %v101
    %v109 = vpack.c.bf16 %v104, %v103
    %v110 = vpack.c.bf16 %v106, %v105
    %v111 = vld [vmem:[%s1] sm:$0xf]
    %v112 = vld [vmem:[%s1 + $0x4] sm:$0xf]
    %v113 = vld [vmem:[%s1 + $0x8] sm:$0xf]
    %v114 = vld [vmem:[%s1 + $0xc] sm:$0xf]
    %v115 = vld [vmem:[%s1 + $0x10] sm:$0xf]
    %v116 = vld [vmem:[%s1 + $0x14] sm:$0xf]
    %v117 = vld [vmem:[%s1 + $0x18] sm:$0xf]
    %v118 = vld [vmem:[%s1 + $0x1c] sm:$0xf]
    %v119 = vld [vmem:[%s1 + $0x20] sm:$0xf]
    %v120 = vld [vmem:[%s1 + $0x24] sm:$0xf]
    %v121 = vld [vmem:[%s1 + $0x28] sm:$0xf]
    %v122 = vld [vmem:[%s1 + $0x2c] sm:$0xf]
    %v123 = vld [vmem:[%s1 + $0x30] sm:$0xf]
    %v124 = vld [vmem:[%s1 + $0x34] sm:$0xf]
    %v125 = vld [vmem:[%s1 + $0x38] sm:$0xf]
    %v126 = vld [vmem:[%s1 + $0x3c] sm:$0xf]
    %v143 = vunpack.c.l.b16 %v111
    %v144 = vunpack.c.l.b16 %v112
    %v145 = vunpack.c.l.b16 %v113
    %v146 = vunpack.c.l.b16 %v114
    %v147 = vunpack.c.l.b16 %v115
    %v148 = vunpack.c.l.b16 %v116
    %v149 = vunpack.c.l.b16 %v117
    %v150 = vunpack.c.l.b16 %v118
    %v151 = vunpack.c.l.b16 %v119
    %v152 = vunpack.c.l.b16 %v120
    %v153 = vunpack.c.l.b16 %v121
    %v154 = vunpack.c.l.b16 %v122
    %v155 = vunpack.c.l.b16 %v123
    %v156 = vunpack.c.l.b16 %v124
    %v157 = vunpack.c.l.b16 %v125
    %v158 = vunpack.c.l.b16 %v126
    %v159 = vpack.c.b16 %v144, %v143
    %v160 = vpack.c.b16 %v146, %v145
    %v161 = vpack.c.b16 %v148, %v147
    %v162 = vpack.c.b16 %v150, %v149
    %v163 = vpack.c.b16 %v152, %v151
    %v164 = vpack.c.b16 %v154, %v153
    %v165 = vpack.c.b16 %v156, %v155
    %v166 = vpack.c.b16 %v158, %v157
    %175 = vmatprep.subr.bf16.mxu0 0
    %176 = vmatpush1.bf16.msra.mxu0 %v159
    %177 = vmatprep.subr.bf16.mxu0 0
    %178 = vmatpush1.bf16.msra.mxu0 %v160
    %179 = vmatprep.subr.bf16.mxu0 0
    %180 = vmatpush1.bf16.msra.mxu0 %v161
    %181 = vmatprep.subr.bf16.mxu0 0
    %182 = vmatpush1.bf16.msra.mxu0 %v162
    %183 = vmatprep.subr.bf16.mxu0 0
    %184 = vmatpush1.bf16.msra.mxu0 %v163
    %185 = vmatprep.subr.bf16.mxu0 0
    %186 = vmatpush1.bf16.msra.mxu0 %v164
    %187 = vmatprep.subr.bf16.mxu0 0
    %188 = vmatpush1.bf16.msra.mxu0 %v165
    %189 = vmatprep.subr.bf16.mxu0 0
    %190 = vmatpush1.bf16.msra.mxu0 %v166
    %191 = vmatprep.subr.bf16.mxu0 0
    %192 = vmatpush1.bf16.msra.mxu0 0
    %193 = vmatprep.subr.bf16.mxu0 0
    %194 = vmatpush1.bf16.msra.mxu0 0
    %195 = vmatprep.subr.bf16.mxu0 0
    %196 = vmatpush1.bf16.msra.mxu0 0
    %197 = vmatprep.subr.bf16.mxu0 0
    %198 = vmatpush1.bf16.msra.mxu0 0
    %199 = vmatprep.subr.bf16.mxu0 0
    %200 = vmatpush1.bf16.msra.mxu0 0
    %201 = vmatprep.subr.bf16.mxu0 0
    %202 = vmatpush1.bf16.msra.mxu0 0
    %203 = vmatprep.subr.bf16.mxu0 0
    %204 = vmatpush1.bf16.msra.mxu0 0
    %205 = vmatprep.subr.bf16.mxu0 0
    %206 = vmatpush1.bf16.msra.mxu0 0
    %207 = vmatprep.mubr.bf16.mxu0 0
    %208 = vmatmul.mubr.bf16.gmra.mrb[0].mxu0 %v107
    %v209 = vpop.f32.mrb[0].mxu0
    %v210 = vadd.f32 0.0, %v209
    %v211 = vpop.f32.mrb[0].mxu0
    %v212 = vpop.f32.mrb[0].mxu0
    %v213 = vadd.f32 0.0, %v212
    %v214 = vpop.f32.mrb[0].mxu0
    %215 = vmatprep.mubr.bf16.mxu0 0
    %216 = vmatmul.mubr.bf16.gmra.mrb[0].mxu0 %v108
    %v217 = vpop.f32.mrb[0].mxu0
    %v218 = vadd.f32 0.0, %v217
    %v219 = vpop.f32.mrb[0].mxu0
    %v220 = vpop.f32.mrb[0].mxu0
    %v221 = vadd.f32 0.0, %v220
    %v222 = vpop.f32.mrb[0].mxu0
    %223 = vmatprep.mubr.bf16.mxu0 0
    %224 = vmatmul.mubr.bf16.gmra.mrb[0].mxu0 %v109
    %v225 = vpop.f32.mrb[0].mxu0
    %v226 = vadd.f32 0.0, %v225
    %v227 = vpop.f32.mrb[0].mxu0
    %v228 = vpop.f32.mrb[0].mxu0
    %v229 = vadd.f32 0.0, %v228
    %v230 = vpop.f32.mrb[0].mxu0
    %231 = vmatprep.mubr.bf16.mxu0 0
    %232 = vmatmul.mubr.bf16.gmra.mrb[0].mxu0 %v110
    %v233 = vpop.f32.mrb[0].mxu0
    %v234 = vadd.f32 0.0, %v233
    %v235 = vpop.f32.mrb[0].mxu0
    %v236 = vpop.f32.mrb[0].mxu0
    %v237 = vadd.f32 0.0, %v236
    %v238 = vpop.f32.mrb[0].mxu0
    %239 = vdwg.mxu0
    %v240 = vpack.c.bf16 %v213, %v210
    %v241 = vpack.c.bf16 %v221, %v218
    %v242 = vpack.c.bf16 %v229, %v226
    %v243 = vpack.c.bf16 %v237, %v234
    %v244 = vld [vmem:[#allocation2] sm:$0xff]
    %v245 = vld [vmem:[#allocation2 + $0x8] sm:$0xff]
    %v246 = vld [vmem:[#allocation2 + $0x10] sm:$0xff]
    %v247 = vld [vmem:[#allocation2 + $0x18] sm:$0xff]
    %v248 = vld [vmem:[#allocation2 + $0x20] sm:$0xff]
    %v249 = vld [vmem:[#allocation2 + $0x28] sm:$0xff]
    %v250 = vld [vmem:[#allocation2 + $0x30] sm:$0xff]
    %v251 = vld [vmem:[#allocation2 + $0x38] sm:$0xff]
    %v252 = vld [vmem:[#allocation2 + $0x40] sm:$0xff]
    %v253 = vld [vmem:[#allocation2 + $0x48] sm:$0xff]
    %v254 = vld [vmem:[#allocation2 + $0x50] sm:$0xff]
    %v255 = vld [vmem:[#allocation2 + $0x58] sm:$0xff]
    %v256 = vld [vmem:[#allocation2 + $0x60] sm:$0xff]
    %v257 = vld [vmem:[#allocation2 + $0x68] sm:$0xff]
    %v258 = vld [vmem:[#allocation2 + $0x70] sm:$0xff]
    %v259 = vld [vmem:[#allocation2 + $0x78] sm:$0xff]
    %v260 = vld [vmem:[#allocation2 + $0x80] sm:$0xff]
    %v261 = vld [vmem:[#allocation2 + $0x88] sm:$0xff]
    %v262 = vld [vmem:[#allocation2 + $0x90] sm:$0xff]
    %v263 = vld [vmem:[#allocation2 + $0x98] sm:$0xff]
    %v264 = vld [vmem:[#allocation2 + $0xa0] sm:$0xff]
    %v265 = vld [vmem:[#allocation2 + $0xa8] sm:$0xff]
    %v266 = vld [vmem:[#allocation2 + $0xb0] sm:$0xff]
    %v267 = vld [vmem:[#allocation2 + $0xb8] sm:$0xff]
    %v268 = vld [vmem:[#allocation2 + $0xc0] sm:$0xff]
    %v269 = vld [vmem:[#allocation2 + $0xc8] sm:$0xff]
    %v270 = vld [vmem:[#allocation2 + $0xd0] sm:$0xff]
    %v271 = vld [vmem:[#allocation2 + $0xd8] sm:$0xff]
    %v272 = vld [vmem:[#allocation2 + $0xe0] sm:$0xff]
    %v273 = vld [vmem:[#allocation2 + $0xe8] sm:$0xff]
    %v274 = vld [vmem:[#allocation2 + $0xf0] sm:$0xff]
    %v275 = vld [vmem:[#allocation2 + $0xf8] sm:$0xff]
    %v276 = vld [vmem:[%s4] sm:$0xf]
    %v278 = vlaneseq
    %v279 = vshrl.u32 %v278, 7
    %v280 = vsub.s32 0, %v279
    %v281 = vrot.slane %v276, %v280
    %v282 = vlaneseq
    %v283 = vshrl.u32 %v282, 7
    %v284 = vsub.s32 1, %v283
    %v285 = vrot.slane %v276, %v284
    %v286 = vlaneseq
    %v287 = vshrl.u32 %v286, 7
    %v288 = vsub.s32 2, %v287
    %v289 = vrot.slane %v276, %v288
    %v290 = vlaneseq
    %v291 = vshrl.u32 %v290, 7
    %v292 = vsub.s32 3, %v291
    %v293 = vrot.slane %v276, %v292
    %v330 = vunpack.c.l.b16 %v244
    %v331 = vunpack.c.h.b16 %v244
    %v332 = vunpack.c.l.b16 %v245
    %v333 = vunpack.c.h.b16 %v245
    %v334 = vunpack.c.l.b16 %v246
    %v335 = vunpack.c.h.b16 %v246
    %v336 = vunpack.c.l.b16 %v247
    %v337 = vunpack.c.h.b16 %v247
    %v338 = vunpack.c.l.b16 %v248
    %v339 = vunpack.c.h.b16 %v248
    %v340 = vunpack.c.l.b16 %v249
    %v341 = vunpack.c.h.b16 %v249
    %v342 = vunpack.c.l.b16 %v250
    %v343 = vunpack.c.h.b16 %v250
    %v344 = vunpack.c.l.b16 %v251
    %v345 = vunpack.c.h.b16 %v251
    %v346 = vunpack.c.l.b16 %v252
    %v347 = vunpack.c.h.b16 %v252
    %v348 = vunpack.c.l.b16 %v253
    %v349 = vunpack.c.h.b16 %v253
    %v350 = vunpack.c.l.b16 %v254
    %v351 = vunpack.c.h.b16 %v254
    %v352 = vunpack.c.l.b16 %v255
    %v353 = vunpack.c.h.b16 %v255
    %v354 = vunpack.c.l.b16 %v256
    %v355 = vunpack.c.h.b16 %v256
    %v356 = vunpack.c.l.b16 %v257
    %v357 = vunpack.c.h.b16 %v257
    %v358 = vunpack.c.l.b16 %v258
    %v359 = vunpack.c.h.b16 %v258
    %v360 = vunpack.c.l.b16 %v259
    %v361 = vunpack.c.h.b16 %v259
    %v362 = vunpack.c.l.b16 %v260
    %v363 = vunpack.c.h.b16 %v260
    %v364 = vunpack.c.l.b16 %v261
    %v365 = vunpack.c.h.b16 %v261
    %v366 = vunpack.c.l.b16 %v262
    %v367 = vunpack.c.h.b16 %v262
    %v368 = vunpack.c.l.b16 %v263
    %v369 = vunpack.c.h.b16 %v263
    %v370 = vunpack.c.l.b16 %v264
    %v371 = vunpack.c.h.b16 %v264
    %v372 = vunpack.c.l.b16 %v265
    %v373 = vunpack.c.h.b16 %v265
    %v374 = vunpack.c.l.b16 %v266
    %v375 = vunpack.c.h.b16 %v266
    %v376 = vunpack.c.l.b16 %v267
    %v377 = vunpack.c.h.b16 %v267
    %v378 = vunpack.c.l.b16 %v268
    %v379 = vunpack.c.h.b16 %v268
    %v380 = vunpack.c.l.b16 %v269
    %v381 = vunpack.c.h.b16 %v269
    %v382 = vunpack.c.l.b16 %v270
    %v383 = vunpack.c.h.b16 %v270
    %v384 = vunpack.c.l.b16 %v271
    %v385 = vunpack.c.h.b16 %v271
    %v386 = vunpack.c.l.b16 %v272
    %v387 = vunpack.c.h.b16 %v272
    %v388 = vunpack.c.l.b16 %v273
    %v389 = vunpack.c.h.b16 %v273
    %v390 = vunpack.c.l.b16 %v274
    %v391 = vunpack.c.h.b16 %v274
    %v392 = vunpack.c.l.b16 %v275
    %v393 = vunpack.c.h.b16 %v275
    %v394 = vpack.c.b16 %v334, %v330
    %v395 = vpack.c.b16 %v335, %v331
    %v396 = vpack.c.b16 %v336, %v332
    %v397 = vpack.c.b16 %v337, %v333
    %v398 = vpack.c.b16 %v342, %v338
    %v399 = vpack.c.b16 %v343, %v339
    %v400 = vpack.c.b16 %v344, %v340
    %v401 = vpack.c.b16 %v345, %v341
    %v402 = vpack.c.b16 %v350, %v346
    %v403 = vpack.c.b16 %v351, %v347
    %v404 = vpack.c.b16 %v352, %v348
    %v405 = vpack.c.b16 %v353, %v349
    %v406 = vpack.c.b16 %v358, %v354
    %v407 = vpack.c.b16 %v359, %v355
    %v408 = vpack.c.b16 %v360, %v356
    %v409 = vpack.c.b16 %v361, %v357
    %v410 = vpack.c.b16 %v366, %v362
    %v411 = vpack.c.b16 %v367, %v363
    %v412 = vpack.c.b16 %v368, %v364
    %v413 = vpack.c.b16 %v369, %v365
    %v414 = vpack.c.b16 %v374, %v370
    %v415 = vpack.c.b16 %v375, %v371
    %v416 = vpack.c.b16 %v376, %v372
    %v417 = vpack.c.b16 %v377, %v373
    %v418 = vpack.c.b16 %v382, %v378
    %v419 = vpack.c.b16 %v383, %v379
    %v420 = vpack.c.b16 %v384, %v380
    %v421 = vpack.c.b16 %v385, %v381
    %v422 = vpack.c.b16 %v390, %v386
    %v423 = vpack.c.b16 %v391, %v387
    %v424 = vpack.c.b16 %v392, %v388
    %v425 = vpack.c.b16 %v393, %v389
    %458 = vmatprep.subr.bf16.mxu0 %v395
    %459 = vmatpush1.bf16.msra.mxu0 %v394
    %460 = vmatprep.subr.bf16.mxu0 %v399
    %461 = vmatpush1.bf16.msra.mxu0 %v398
    %462 = vmatprep.subr.bf16.mxu0 %v403
    %463 = vmatpush1.bf16.msra.mxu0 %v402
    %464 = vmatprep.subr.bf16.mxu0 %v407
    %465 = vmatpush1.bf16.msra.mxu0 %v406
    %466 = vmatprep.subr.bf16.mxu0 %v411
    %467 = vmatpush1.bf16.msra.mxu0 %v410
    %468 = vmatprep.subr.bf16.mxu0 %v415
    %469 = vmatpush1.bf16.msra.mxu0 %v414
    %470 = vmatprep.subr.bf16.mxu0 %v419
    %471 = vmatpush1.bf16.msra.mxu0 %v418
    %472 = vmatprep.subr.bf16.mxu0 %v423
    %473 = vmatpush1.bf16.msra.mxu0 %v422
    %474 = vmatprep.subr.bf16.mxu0 0
    %475 = vmatpush1.bf16.msra.mxu0 0
    %476 = vmatprep.subr.bf16.mxu0 0
    %477 = vmatpush1.bf16.msra.mxu0 0
    %478 = vmatprep.subr.bf16.mxu0 0
    %479 = vmatpush1.bf16.msra.mxu0 0
    %480 = vmatprep.subr.bf16.mxu0 0
    %481 = vmatpush1.bf16.msra.mxu0 0
    %482 = vmatprep.subr.bf16.mxu0 0
    %483 = vmatpush1.bf16.msra.mxu0 0
    %484 = vmatprep.subr.bf16.mxu0 0
    %485 = vmatpush1.bf16.msra.mxu0 0
    %486 = vmatprep.subr.bf16.mxu0 0
    %487 = vmatpush1.bf16.msra.mxu0 0
    %488 = vmatprep.subr.bf16.mxu0 0
    %489 = vmatpush1.bf16.msra.mxu0 0
    %490 = vmatprep.mubr.bf16.mxu0 0
    %491 = vmatmul.mubr.bf16.gmra.mrb[0].mxu0 %v240
    %v492 = vpop.f32.mrb[0].mxu0
    %v493 = vadd.f32 %v281, %v492
    %v494 = vpop.f32.mrb[0].mxu0
    %v495 = vadd.f32 %v285, %v494
    %v496 = vpop.f32.mrb[0].mxu0
    %v497 = vadd.f32 %v281, %v496
    %v498 = vpop.f32.mrb[0].mxu0
    %v499 = vadd.f32 %v285, %v498
    %500 = vmatprep.mubr.bf16.mxu0 0
    %501 = vmatmul.mubr.bf16.gmra.mrb[0].mxu0 %v241
    %v502 = vpop.f32.mrb[0].mxu0
    %v503 = vadd.f32 %v281, %v502
    %v504 = vpop.f32.mrb[0].mxu0
    %v505 = vadd.f32 %v285, %v504
    %v506 = vpop.f32.mrb[0].mxu0
    %v507 = vadd.f32 %v281, %v506
    %v508 = vpop.f32.mrb[0].mxu0
    %v509 = vadd.f32 %v285, %v508
    %510 = vmatprep.mubr.bf16.mxu0 0
    %511 = vmatmul.mubr.bf16.gmra.mrb[0].mxu0 %v242
    %v512 = vpop.f32.mrb[0].mxu0
    %v513 = vadd.f32 %v281, %v512
    %v514 = vpop.f32.mrb[0].mxu0
    %v515 = vadd.f32 %v285, %v514
    %v516 = vpop.f32.mrb[0].mxu0
    %v517 = vadd.f32 %v281, %v516
    %v518 = vpop.f32.mrb[0].mxu0
    %v519 = vadd.f32 %v285, %v518
    %520 = vmatprep.mubr.bf16.mxu0 0
    %521 = vmatmul.mubr.bf16.gmra.mrb[0].mxu0 %v243
    %v522 = vpop.f32.mrb[0].mxu0
    %v523 = vadd.f32 %v281, %v522
    %v524 = vpop.f32.mrb[0].mxu0
    %v525 = vadd.f32 %v285, %v524
    %v526 = vpop.f32.mrb[0].mxu0
    %v527 = vadd.f32 %v281, %v526
    %v528 = vpop.f32.mrb[0].mxu0
    %v529 = vadd.f32 %v285, %v528
    %530 = vdwg.mxu0
    %531 = vmatprep.subr.bf16.mxu0 %v397
    %532 = vmatpush1.bf16.msra.mxu0 %v396
    %533 = vmatprep.subr.bf16.mxu0 %v401
    %534 = vmatpush1.bf16.msra.mxu0 %v400
    %535 = vmatprep.subr.bf16.mxu0 %v405
    %536 = vmatpush1.bf16.msra.mxu0 %v404
    %537 = vmatprep.subr.bf16.mxu0 %v409
    %538 = vmatpush1.bf16.msra.mxu0 %v408
    %539 = vmatprep.subr.bf16.mxu0 %v413
    %540 = vmatpush1.bf16.msra.mxu0 %v412
    %541 = vmatprep.subr.bf16.mxu0 %v417
    %542 = vmatpush1.bf16.msra.mxu0 %v416
    %543 = vmatprep.subr.bf16.mxu0 %v421
    %544 = vmatpush1.bf16.msra.mxu0 %v420
    %545 = vmatprep.subr.bf16.mxu0 %v425
    %546 = vmatpush1.bf16.msra.mxu0 %v424
    %547 = vmatprep.subr.bf16.mxu0 0
    %548 = vmatpush1.bf16.msra.mxu0 0
    %549 = vmatprep.subr.bf16.mxu0 0
    %550 = vmatpush1.bf16.msra.mxu0 0
    %551 = vmatprep.subr.bf16.mxu0 0
    %552 = vmatpush1.bf16.msra.mxu0 0
    %553 = vmatprep.subr.bf16.mxu0 0
    %554 = vmatpush1.bf16.msra.mxu0 0
    %555 = vmatprep.subr.bf16.mxu0 0
    %556 = vmatpush1.bf16.msra.mxu0 0
    %557 = vmatprep.subr.bf16.mxu0 0
    %558 = vmatpush1.bf16.msra.mxu0 0
    %559 = vmatprep.subr.bf16.mxu0 0
    %560 = vmatpush1.bf16.msra.mxu0 0
    %561 = vmatprep.subr.bf16.mxu0 0
    %562 = vmatpush1.bf16.msra.mxu0 0
    %563 = vmatprep.mubr.bf16.mxu0 0
    %564 = vmatmul.mubr.bf16.gmra.mrb[0].mxu0 %v240
    %v565 = vpop.f32.mrb[0].mxu0
    %v566 = vadd.f32 %v289, %v565
    %v567 = vpop.f32.mrb[0].mxu0
    %v568 = vadd.f32 %v293, %v567
    %v569 = vpop.f32.mrb[0].mxu0
    %v570 = vadd.f32 %v289, %v569
    %v571 = vpop.f32.mrb[0].mxu0
    %v572 = vadd.f32 %v293, %v571
    %573 = vmatprep.mubr.bf16.mxu0 0
    %574 = vmatmul.mubr.bf16.gmra.mrb[0].mxu0 %v241
    %v575 = vpop.f32.mrb[0].mxu0
    %v576 = vadd.f32 %v289, %v575
    %v577 = vpop.f32.mrb[0].mxu0
    %v578 = vadd.f32 %v293, %v577
    %v579 = vpop.f32.mrb[0].mxu0
    %v580 = vadd.f32 %v289, %v579
    %v581 = vpop.f32.mrb[0].mxu0
    %v582 = vadd.f32 %v293, %v581
    %583 = vmatprep.mubr.bf16.mxu0 0
    %584 = vmatmul.mubr.bf16.gmra.mrb[0].mxu0 %v242
    %v585 = vpop.f32.mrb[0].mxu0
    %v586 = vadd.f32 %v289, %v585
    %v587 = vpop.f32.mrb[0].mxu0
    %v588 = vadd.f32 %v293, %v587
    %v589 = vpop.f32.mrb[0].mxu0
    %v590 = vadd.f32 %v289, %v589
    %v591 = vpop.f32.mrb[0].mxu0
    %v592 = vadd.f32 %v293, %v591
    %593 = vmatprep.mubr.bf16.mxu0 0
    %594 = vmatmul.mubr.bf16.gmra.mrb[0].mxu0 %v243
    %v595 = vpop.f32.mrb[0].mxu0
    %v596 = vadd.f32 %v289, %v595
    %v597 = vpop.f32.mrb[0].mxu0
    %v598 = vadd.f32 %v293, %v597
    %v599 = vpop.f32.mrb[0].mxu0
    %v600 = vadd.f32 %v289, %v599
    %v601 = vpop.f32.mrb[0].mxu0
    %v602 = vadd.f32 %v293, %v601
    %603 = vdwg.mxu0
    %v604 = vld [vmem:[#allocation4] sm:$0xff]
    %v605 = vld [vmem:[#allocation4 + $0x8] sm:$0xff]
    %v606 = vld [vmem:[#allocation4 + $0x10] sm:$0xff]
    %v607 = vld [vmem:[#allocation4 + $0x18] sm:$0xff]
    %v608 = vld [vmem:[#allocation4 + $0x20] sm:$0xff]
    %v609 = vld [vmem:[#allocation4 + $0x28] sm:$0xff]
    %v610 = vld [vmem:[#allocation4 + $0x30] sm:$0xff]
    %v611 = vld [vmem:[#allocation4 + $0x38] sm:$0xff]
    %v612 = vld [vmem:[#allocation4 + $0x40] sm:$0xff]
    %v613 = vld [vmem:[#allocation4 + $0x48] sm:$0xff]
    %v614 = vld [vmem:[#allocation4 + $0x50] sm:$0xff]
    %v615 = vld [vmem:[#allocation4 + $0x58] sm:$0xff]
    %v616 = vld [vmem:[#allocation4 + $0x60] sm:$0xff]
    %v617 = vld [vmem:[#allocation4 + $0x68] sm:$0xff]
    %v618 = vld [vmem:[#allocation4 + $0x70] sm:$0xff]
    %v619 = vld [vmem:[#allocation4 + $0x78] sm:$0xff]
    %v620 = vld [vmem:[#allocation4 + $0x80] sm:$0xff]
    %v621 = vld [vmem:[#allocation4 + $0x88] sm:$0xff]
    %v622 = vld [vmem:[#allocation4 + $0x90] sm:$0xff]
    %v623 = vld [vmem:[#allocation4 + $0x98] sm:$0xff]
    %v624 = vld [vmem:[#allocation4 + $0xa0] sm:$0xff]
    %v625 = vld [vmem:[#allocation4 + $0xa8] sm:$0xff]
    %v626 = vld [vmem:[#allocation4 + $0xb0] sm:$0xff]
    %v627 = vld [vmem:[#allocation4 + $0xb8] sm:$0xff]
    %v628 = vld [vmem:[#allocation4 + $0xc0] sm:$0xff]
    %v629 = vld [vmem:[#allocation4 + $0xc8] sm:$0xff]
    %v630 = vld [vmem:[#allocation4 + $0xd0] sm:$0xff]
    %v631 = vld [vmem:[#allocation4 + $0xd8] sm:$0xff]
    %v632 = vld [vmem:[#allocation4 + $0xe0] sm:$0xff]
    %v633 = vld [vmem:[#allocation4 + $0xe8] sm:$0xff]
    %v634 = vld [vmem:[#allocation4 + $0xf0] sm:$0xff]
    %v635 = vld [vmem:[#allocation4 + $0xf8] sm:$0xff]
    %v668 = vunpack.c.l.b16 %v604
    %v669 = vunpack.c.h.b16 %v604
    %v670 = vunpack.c.l.b16 %v605
    %v671 = vunpack.c.h.b16 %v605
    %v672 = vunpack.c.l.b16 %v606
    %v673 = vunpack.c.h.b16 %v606
    %v674 = vunpack.c.l.b16 %v607
    %v675 = vunpack.c.h.b16 %v607
    %v676 = vunpack.c.l.b16 %v608
    %v677 = vunpack.c.h.b16 %v608
    %v678 = vunpack.c.l.b16 %v609
    %v679 = vunpack.c.h.b16 %v609
    %v680 = vunpack.c.l.b16 %v610
    %v681 = vunpack.c.h.b16 %v610
    %v682 = vunpack.c.l.b16 %v611
    %v683 = vunpack.c.h.b16 %v611
    %v684 = vunpack.c.l.b16 %v612
    %v685 = vunpack.c.h.b16 %v612
    %v686 = vunpack.c.l.b16 %v613
    %v687 = vunpack.c.h.b16 %v613
    %v688 = vunpack.c.l.b16 %v614
    %v689 = vunpack.c.h.b16 %v614
    %v690 = vunpack.c.l.b16 %v615
    %v691 = vunpack.c.h.b16 %v615
    %v692 = vunpack.c.l.b16 %v616
    %v693 = vunpack.c.h.b16 %v616
    %v694 = vunpack.c.l.b16 %v617
    %v695 = vunpack.c.h.b16 %v617
    %v696 = vunpack.c.l.b16 %v618
    %v697 = vunpack.c.h.b16 %v618
    %v698 = vunpack.c.l.b16 %v619
    %v699 = vunpack.c.h.b16 %v619
    %v700 = vunpack.c.l.b16 %v620
    %v701 = vunpack.c.h.b16 %v620
    %v702 = vunpack.c.l.b16 %v621
    %v703 = vunpack.c.h.b16 %v621
    %v704 = vunpack.c.l.b16 %v622
    %v705 = vunpack.c.h.b16 %v622
    %v706 = vunpack.c.l.b16 %v623
    %v707 = vunpack.c.h.b16 %v623
    %v708 = vunpack.c.l.b16 %v624
    %v709 = vunpack.c.h.b16 %v624
    %v710 = vunpack.c.l.b16 %v625
    %v711 = vunpack.c.h.b16 %v625
    %v712 = vunpack.c.l.b16 %v626
    %v713 = vunpack.c.h.b16 %v626
    %v714 = vunpack.c.l.b16 %v627
    %v715 = vunpack.c.h.b16 %v627
    %v716 = vunpack.c.l.b16 %v628
    %v717 = vunpack.c.h.b16 %v628
    %v718 = vunpack.c.l.b16 %v629
    %v719 = vunpack.c.h.b16 %v629
    %v720 = vunpack.c.l.b16 %v630
    %v721 = vunpack.c.h.b16 %v630
    %v722 = vunpack.c.l.b16 %v631
    %v723 = vunpack.c.h.b16 %v631
    %v724 = vunpack.c.l.b16 %v632
    %v725 = vunpack.c.h.b16 %v632
    %v726 = vunpack.c.l.b16 %v633
    %v727 = vunpack.c.h.b16 %v633
    %v728 = vunpack.c.l.b16 %v634
    %v729 = vunpack.c.h.b16 %v634
    %v730 = vunpack.c.l.b16 %v635
    %v731 = vunpack.c.h.b16 %v635
    %v732 = vpack.c.b16 %v672, %v668
    %v733 = vpack.c.b16 %v673, %v669
    %v734 = vpack.c.b16 %v674, %v670
    %v735 = vpack.c.b16 %v675, %v671
    %v736 = vpack.c.b16 %v680, %v676
    %v737 = vpack.c.b16 %v681, %v677
    %v738 = vpack.c.b16 %v682, %v678
    %v739 = vpack.c.b16 %v683, %v679
    %v740 = vpack.c.b16 %v688, %v684
    %v741 = vpack.c.b16 %v689, %v685
    %v742 = vpack.c.b16 %v690, %v686
    %v743 = vpack.c.b16 %v691, %v687
    %v744 = vpack.c.b16 %v696, %v692
    %v745 = vpack.c.b16 %v697, %v693
    %v746 = vpack.c.b16 %v698, %v694
    %v747 = vpack.c.b16 %v699, %v695
    %v748 = vpack.c.b16 %v704, %v700
    %v749 = vpack.c.b16 %v705, %v701
    %v750 = vpack.c.b16 %v706, %v702
    %v751 = vpack.c.b16 %v707, %v703
    %v752 = vpack.c.b16 %v712, %v708
    %v753 = vpack.c.b16 %v713, %v709
    %v754 = vpack.c.b16 %v714, %v710
    %v755 = vpack.c.b16 %v715, %v711
    %v756 = vpack.c.b16 %v720, %v716
    %v757 = vpack.c.b16 %v721, %v717
    %v758 = vpack.c.b16 %v722, %v718
    %v759 = vpack.c.b16 %v723, %v719
    %v760 = vpack.c.b16 %v728, %v724
    %v761 = vpack.c.b16 %v729, %v725
    %v762 = vpack.c.b16 %v730, %v726
    %v763 = vpack.c.b16 %v731, %v727
    %796 = vmatprep.subr.bf16.mxu0 %v733
    %797 = vmatpush1.bf16.msra.mxu0 %v732
    %798 = vmatprep.subr.bf16.mxu0 %v737
    %799 = vmatpush1.bf16.msra.mxu0 %v736
    %800 = vmatprep.subr.bf16.mxu0 %v741
    %801 = vmatpush1.bf16.msra.mxu0 %v740
    %802 = vmatprep.subr.bf16.mxu0 %v745
    %803 = vmatpush1.bf16.msra.mxu0 %v744
    %804 = vmatprep.subr.bf16.mxu0 %v749
    %805 = vmatpush1.bf16.msra.mxu0 %v748
    %806 = vmatprep.subr.bf16.mxu0 %v753
    %807 = vmatpush1.bf16.msra.mxu0 %v752
    %808 = vmatprep.subr.bf16.mxu0 %v757
    %809 = vmatpush1.bf16.msra.mxu0 %v756
    %810 = vmatprep.subr.bf16.mxu0 %v761
    %811 = vmatpush1.bf16.msra.mxu0 %v760
    %812 = vmatprep.subr.bf16.mxu0 0
    %813 = vmatpush1.bf16.msra.mxu0 0
    %814 = vmatprep.subr.bf16.mxu0 0
    %815 = vmatpush1.bf16.msra.mxu0 0
    %816 = vmatprep.subr.bf16.mxu0 0
    %817 = vmatpush1.bf16.msra.mxu0 0
    %818 = vmatprep.subr.bf16.mxu0 0
    %819 = vmatpush1.bf16.msra.mxu0 0
    %820 = vmatprep.subr.bf16.mxu0 0
    %821 = vmatpush1.bf16.msra.mxu0 0
    %822 = vmatprep.subr.bf16.mxu0 0
    %823 = vmatpush1.bf16.msra.mxu0 0
    %824 = vmatprep.subr.bf16.mxu0 0
    %825 = vmatpush1.bf16.msra.mxu0 0
    %826 = vmatprep.subr.bf16.mxu0 0
    %827 = vmatpush1.bf16.msra.mxu0 0
    %828 = vmatprep.mubr.bf16.mxu0 0
    %829 = vmatmul.mubr.bf16.gmra.mrb[0].mxu0 0
    %v830 = vpop.f32.mrb[0].mxu0
    %v831 = vadd.f32 0.0, %v830
    %v832 = vpop.f32.mrb[0].mxu0
    %v833 = vadd.f32 0.0, %v832
    %v834 = vpop.f32.mrb[0].mxu0
    %v835 = vpop.f32.mrb[0].mxu0
    %836 = vdwg.mxu0
    %837 = vmatprep.subr.bf16.mxu0 %v735
    %838 = vmatpush1.bf16.msra.mxu0 %v734
    %839 = vmatprep.subr.bf16.mxu0 %v739
    %840 = vmatpush1.bf16.msra.mxu0 %v738
    %841 = vmatprep.subr.bf16.mxu0 %v743
    %842 = vmatpush1.bf16.msra.mxu0 %v742
    %843 = vmatprep.subr.bf16.mxu0 %v747
    %844 = vmatpush1.bf16.msra.mxu0 %v746
    %845 = vmatprep.subr.bf16.mxu0 %v751
    %846 = vmatpush1.bf16.msra.mxu0 %v750
    %847 = vmatprep.subr.bf16.mxu0 %v755
    %848 = vmatpush1.bf16.msra.mxu0 %v754
    %849 = vmatprep.subr.bf16.mxu0 %v759
    %850 = vmatpush1.bf16.msra.mxu0 %v758
    %851 = vmatprep.subr.bf16.mxu0 %v763
    %852 = vmatpush1.bf16.msra.mxu0 %v762
    %853 = vmatprep.subr.bf16.mxu0 0
    %854 = vmatpush1.bf16.msra.mxu0 0
    %855 = vmatprep.subr.bf16.mxu0 0
    %856 = vmatpush1.bf16.msra.mxu0 0
    %857 = vmatprep.subr.bf16.mxu0 0
    %858 = vmatpush1.bf16.msra.mxu0 0
    %859 = vmatprep.subr.bf16.mxu0 0
    %860 = vmatpush1.bf16.msra.mxu0 0
    %861 = vmatprep.subr.bf16.mxu0 0
    %862 = vmatpush1.bf16.msra.mxu0 0
    %863 = vmatprep.subr.bf16.mxu0 0
    %864 = vmatpush1.bf16.msra.mxu0 0
    %865 = vmatprep.subr.bf16.mxu0 0
    %866 = vmatpush1.bf16.msra.mxu0 0
    %867 = vmatprep.subr.bf16.mxu0 0
    %868 = vmatpush1.bf16.msra.mxu0 0
    %869 = vmatprep.mubr.bf16.mxu0 0
    %870 = vmatmul.mubr.bf16.gmra.mrb[0].mxu0 0
    %v871 = vpop.f32.mrb[0].mxu0
    %v872 = vadd.f32 0.0, %v871
    %v873 = vpop.f32.mrb[0].mxu0
    %v874 = vadd.f32 0.0, %v873
    %v875 = vpop.f32.mrb[0].mxu0
    %v876 = vpop.f32.mrb[0].mxu0
    %877 = vdwg.mxu0
    %v878 = vadd.f32 %v493, %v831
    %v879 = vadd.f32 %v495, %v833
    %v880 = vadd.f32 %v566, %v872
    %v881 = vadd.f32 %v568, %v874
    %v882 = vxor.u32 %v878, 2147483648
    %v883 = vmul.f32 %v882, 1.442695
    %v884 = vpow.pop %v883
    %v885 = vadd.f32 %v884, 1.0
    %v886 = vrcp.pop %v885
    %v887 = vmul.f32 1.0, %v886
    %v888 = vxor.u32 %v879, 2147483648
    %v889 = vmul.f32 %v888, 1.442695
    %v890 = vpow.pop %v889
    %v891 = vadd.f32 %v890, 1.0
    %v892 = vrcp.pop %v891
    %v893 = vmul.f32 1.0, %v892
    %v894 = vtanh.pop %v880
    %v895 = vxor.u32 %v881, 2147483648
    %v896 = vmul.f32 %v895, 1.442695
    %v897 = vpow.pop %v896
    %v898 = vadd.f32 %v897, 1.0
    %v899 = vrcp.pop %v898
    %v900 = vmul.f32 1.0, %v899
    %v901 = vmul.f32 %v893, 0.0
    %v902 = vmul.f32 %v887, %v894
    %v903 = vadd.f32 %v901, %v902
    %v904 = vtanh.pop %v903
    %v905 = vmul.f32 %v900, %v904
    %v906 = vpack.c.bf16 %v905, %v905
    %907 = vmatprep.subr.bf16.mxu0 %v733
    %908 = vmatpush1.bf16.msra.mxu0 %v732
    %909 = vmatprep.subr.bf16.mxu0 %v737
    %910 = vmatpush1.bf16.msra.mxu0 %v736
    %911 = vmatprep.subr.bf16.mxu0 %v741
    %912 = vmatpush1.bf16.msra.mxu0 %v740
    %913 = vmatprep.subr.bf16.mxu0 %v745
    %914 = vmatpush1.bf16.msra.mxu0 %v744
    %915 = vmatprep.subr.bf16.mxu0 %v749
    %916 = vmatpush1.bf16.msra.mxu0 %v748
    %917 = vmatprep.subr.bf16.mxu0 %v753
    %918 = vmatpush1.bf16.msra.mxu0 %v752
    %919 = vmatprep.subr.bf16.mxu0 %v757
    %920 = vmatpush1.bf16.msra.mxu0 %v756
    %921 = vmatprep.subr.bf16.mxu0 %v761
    %922 = vmatpush1.bf16.msra.mxu0 %v760
    %923 = vmatprep.subr.bf16.mxu0 0
    %924 = vmatpush1.bf16.msra.mxu0 0
    %925 = vmatprep.subr.bf16.mxu0 0
    %926 = vmatpush1.bf16.msra.mxu0 0
    %927 = vmatprep.subr.bf16.mxu0 0
    %928 = vmatpush1.bf16.msra.mxu0 0
    %929 = vmatprep.subr.bf16.mxu0 0
    %930 = vmatpush1.bf16.msra.mxu0 0
    %931 = vmatprep.subr.bf16.mxu0 0
    %932 = vmatpush1.bf16.msra.mxu0 0
    %933 = vmatprep.subr.bf16.mxu0 0
    %934 = vmatpush1.bf16.msra.mxu0 0
    %935 = vmatprep.subr.bf16.mxu0 0
    %936 = vmatpush1.bf16.msra.mxu0 0
    %937 = vmatprep.subr.bf16.mxu0 0
    %938 = vmatpush1.bf16.msra.mxu0 0
    %939 = vmatprep.mubr.bf16.mxu0 0
    %940 = vmatmul.mubr.bf16.gmra.mrb[0].mxu0 %v906
    %v941 = vpop.f32.mrb[0].mxu0
    %v942 = vadd.f32 0.0, %v941
    %v943 = vpop.f32.mrb[0].mxu0
    %v944 = vadd.f32 0.0, %v943
    %v945 = vpop.f32.mrb[0].mxu0
    %v946 = vpop.f32.mrb[0].mxu0
    %947 = vdwg.mxu0
    %948 = vmatprep.subr.bf16.mxu0 %v735
    %949 = vmatpush1.bf16.msra.mxu0 %v734
    %950 = vmatprep.subr.bf16.mxu0 %v739
    %951 = vmatpush1.bf16.msra.mxu0 %v738
    %952 = vmatprep.subr.bf16.mxu0 %v743
    %953 = vmatpush1.bf16.msra.mxu0 %v742
    %954 = vmatprep.subr.bf16.mxu0 %v747
    %955 = vmatpush1.bf16.msra.mxu0 %v746
    %956 = vmatprep.subr.bf16.mxu0 %v751
    %957 = vmatpush1.bf16.msra.mxu0 %v750
    %958 = vmatprep.subr.bf16.mxu0 %v755
    %959 = vmatpush1.bf16.msra.mxu0 %v754
    %960 = vmatprep.subr.bf16.mxu0 %v759
    %961 = vmatpush1.bf16.msra.mxu0 %v758
    %962 = vmatprep.subr.bf16.mxu0 %v763
    %963 = vmatpush1.bf16.msra.mxu0 %v762
    %964 = vmatprep.subr.bf16.mxu0 0
    %965 = vmatpush1.bf16.msra.mxu0 0
    %966 = vmatprep.subr.bf16.mxu0 0
    %967 = vmatpush1.bf16.msra.mxu0 0
    %968 = vmatprep.subr.bf16.mxu0 0
    %969 = vmatpush1.bf16.msra.mxu0 0
    %970 = vmatprep.subr.bf16.mxu0 0
    %971 = vmatpush1.bf16.msra.mxu0 0
    %972 = vmatprep.subr.bf16.mxu0 0
    %973 = vmatpush1.bf16.msra.mxu0 0
    %974 = vmatprep.subr.bf16.mxu0 0
    %975 = vmatpush1.bf16.msra.mxu0 0
    %976 = vmatprep.subr.bf16.mxu0 0
    %977 = vmatpush1.bf16.msra.mxu0 0
    %978 = vmatprep.subr.bf16.mxu0 0
    %979 = vmatpush1.bf16.msra.mxu0 0
    %980 = vmatprep.mubr.bf16.mxu0 0
    %981 = vmatmul.mubr.bf16.gmra.mrb[0].mxu0 %v906
    %v982 = vpop.f32.mrb[0].mxu0
    %v983 = vadd.f32 0.0, %v982
    %v984 = vpop.f32.mrb[0].mxu0
    %v985 = vadd.f32 0.0, %v984
    %v986 = vpop.f32.mrb[0].mxu0
    %v987 = vpop.f32.mrb[0].mxu0
    %988 = vdwg.mxu0
    %v989 = vadd.f32 %v497, %v942
    %v990 = vadd.f32 %v499, %v944
    %v991 = vadd.f32 %v570, %v983
    %v992 = vadd.f32 %v572, %v985
    %v993 = vxor.u32 %v989, 2147483648
    %v994 = vmul.f32 %v993, 1.442695
    %v995 = vpow.pop %v994
    %v996 = vadd.f32 %v995, 1.0
    %v997 = vrcp.pop %v996
    %v998 = vmul.f32 1.0, %v997
    %v999 = vxor.u32 %v990, 2147483648
    %v1000 = vmul.f32 %v999, 1.442695
    %v1001 = vpow.pop %v1000
    %v1002 = vadd.f32 %v1001, 1.0
    %v1003 = vrcp.pop %v1002
    %v1004 = vmul.f32 1.0, %v1003
    %v1005 = vtanh.pop %v991
    %v1006 = vxor.u32 %v992, 2147483648
    %v1007 = vmul.f32 %v1006, 1.442695
    %v1008 = vpow.pop %v1007
    %v1009 = vadd.f32 %v1008, 1.0
    %v1010 = vrcp.pop %v1009
    %v1011 = vmul.f32 1.0, %v1010
    %v1012 = vmul.f32 %v1004, %v903
    %v1013 = vmul.f32 %v998, %v1005
    %v1014 = vadd.f32 %v1012, %v1013
    %v1015 = vtanh.pop %v1014
    %v1016 = vmul.f32 %v1011, %v1015
    %v1017 = vpack.c.bf16 %v1016, %v1016
    %1018 = vmatprep.subr.bf16.mxu0 %v733
    %1019 = vmatpush1.bf16.msra.mxu0 %v732
    %1020 = vmatprep.subr.bf16.mxu0 %v737
    %1021 = vmatpush1.bf16.msra.mxu0 %v736
    %1022 = vmatprep.subr.bf16.mxu0 %v741
    %1023 = vmatpush1.bf16.msra.mxu0 %v740
    %1024 = vmatprep.subr.bf16.mxu0 %v745
    %1025 = vmatpush1.bf16.msra.mxu0 %v744
    %1026 = vmatprep.subr.bf16.mxu0 %v749
    %1027 = vmatpush1.bf16.msra.mxu0 %v748
    %1028 = vmatprep.subr.bf16.mxu0 %v753
    %1029 = vmatpush1.bf16.msra.mxu0 %v752
    %1030 = vmatprep.subr.bf16.mxu0 %v757
    %1031 = vmatpush1.bf16.msra.mxu0 %v756
    %1032 = vmatprep.subr.bf16.mxu0 %v761
    %1033 = vmatpush1.bf16.msra.mxu0 %v760
    %1034 = vmatprep.subr.bf16.mxu0 0
    %1035 = vmatpush1.bf16.msra.mxu0 0
    %1036 = vmatprep.subr.bf16.mxu0 0
    %1037 = vmatpush1.bf16.msra.mxu0 0
    %1038 = vmatprep.subr.bf16.mxu0 0
    %1039 = vmatpush1.bf16.msra.mxu0 0
    %1040 = vmatprep.subr.bf16.mxu0 0
    %1041 = vmatpush1.bf16.msra.mxu0 0
    %1042 = vmatprep.subr.bf16.mxu0 0
    %1043 = vmatpush1.bf16.msra.mxu0 0
    %1044 = vmatprep.subr.bf16.mxu0 0
    %1045 = vmatpush1.bf16.msra.mxu0 0
    %1046 = vmatprep.subr.bf16.mxu0 0
    %1047 = vmatpush1.bf16.msra.mxu0 0
    %1048 = vmatprep.subr.bf16.mxu0 0
    %1049 = vmatpush1.bf16.msra.mxu0 0
    %1050 = vmatprep.mubr.bf16.mxu0 0
    %1051 = vmatmul.mubr.bf16.gmra.mrb[0].mxu0 %v1017
    %v1052 = vpop.f32.mrb[0].mxu0
    %v1053 = vadd.f32 0.0, %v1052
    %v1054 = vpop.f32.mrb[0].mxu0
    %v1055 = vadd.f32 0.0, %v1054
    %v1056 = vpop.f32.mrb[0].mxu0
    %v1057 = vpop.f32.mrb[0].mxu0
    %1058 = vdwg.mxu0
    %1059 = vmatprep.subr.bf16.mxu0 %v735
    %1060 = vmatpush1.bf16.msra.mxu0 %v734
    %1061 = vmatprep.subr.bf16.mxu0 %v739
    %1062 = vmatpush1.bf16.msra.mxu0 %v738
    %1063 = vmatprep.subr.bf16.mxu0 %v743
    %1064 = vmatpush1.bf16.msra.mxu0 %v742
    %1065 = vmatprep.subr.bf16.mxu0 %v747
    %1066 = vmatpush1.bf16.msra.mxu0 %v746
    %1067 = vmatprep.subr.bf16.mxu0 %v751
    %1068 = vmatpush1.bf16.msra.mxu0 %v750
    %1069 = vmatprep.subr.bf16.mxu0 %v755
    %1070 = vmatpush1.bf16.msra.mxu0 %v754
    %1071 = vmatprep.subr.bf16.mxu0 %v759
    %1072 = vmatpush1.bf16.msra.mxu0 %v758
    %1073 = vmatprep.subr.bf16.mxu0 %v763
    %1074 = vmatpush1.bf16.msra.mxu0 %v762
    %1075 = vmatprep.subr.bf16.mxu0 0
    %1076 = vmatpush1.bf16.msra.mxu0 0
    %1077 = vmatprep.subr.bf16.mxu0 0
    %1078 = vmatpush1.bf16.msra.mxu0 0
    %1079 = vmatprep.subr.bf16.mxu0 0
    %1080 = vmatpush1.bf16.msra.mxu0 0
    %1081 = vmatprep.subr.bf16.mxu0 0
    %1082 = vmatpush1.bf16.msra.mxu0 0
    %1083 = vmatprep.subr.bf16.mxu0 0
    %1084 = vmatpush1.bf16.msra.mxu0 0
    %1085 = vmatprep.subr.bf16.mxu0 0
    %1086 = vmatpush1.bf16.msra.mxu0 0
    %1087 = vmatprep.subr.bf16.mxu0 0
    %1088 = vmatpush1.bf16.msra.mxu0 0
    %1089 = vmatprep.subr.bf16.mxu0 0
    %1090 = vmatpush1.bf16.msra.mxu0 0
    %1091 = vmatprep.mubr.bf16.mxu0 0
    %1092 = vmatmul.mubr.bf16.gmra.mrb[0].mxu0 %v1017
    %v1093 = vpop.f32.mrb[0].mxu0
    %v1094 = vadd.f32 0.0, %v1093
    %v1095 = vpop.f32.mrb[0].mxu0
    %v1096 = vadd.f32 0.0, %v1095
    %v1097 = vpop.f32.mrb[0].mxu0
    %v1098 = vpop.f32.mrb[0].mxu0
    %1099 = vdwg.mxu0
    %v1100 = vadd.f32 %v503, %v1053
    %v1101 = vadd.f32 %v505, %v1055
    %v1102 = vadd.f32 %v576, %v1094
    %v1103 = vadd.f32 %v578, %v1096
    %v1104 = vxor.u32 %v1100, 2147483648
    %v1105 = vmul.f32 %v1104, 1.442695
    %v1106 = vpow.pop %v1105
    %v1107 = vadd.f32 %v1106, 1.0
    %v1108 = vrcp.pop %v1107
    %v1109 = vmul.f32 1.0, %v1108
    %v1110 = vxor.u32 %v1101, 2147483648
    %v1111 = vmul.f32 %v1110, 1.442695
    %v1112 = vpow.pop %v1111
    %v1113 = vadd.f32 %v1112, 1.0
    %v1114 = vrcp.pop %v1113
    %v1115 = vmul.f32 1.0, %v1114
    %v1116 = vtanh.pop %v1102
    %v1117 = vxor.u32 %v1103, 2147483648
    %v1118 = vmul.f32 %v1117, 1.442695
    %v1119 = vpow.pop %v1118
    %v1120 = vadd.f32 %v1119, 1.0
    %v1121 = vrcp.pop %v1120
    %v1122 = vmul.f32 1.0, %v1121
    %v1123 = vmul.f32 %v1115, %v1014
    %v1124 = vmul.f32 %v1109, %v1116
    %v1125 = vadd.f32 %v1123, %v1124
    %v1126 = vtanh.pop %v1125
    %v1127 = vmul.f32 %v1122, %v1126
    %v1128 = vpack.c.bf16 %v1127, %v1127
    %1129 = vmatprep.subr.bf16.mxu0 %v733
    %1130 = vmatpush1.bf16.msra.mxu0 %v732
    %1131 = vmatprep.subr.bf16.mxu0 %v737
    %1132 = vmatpush1.bf16.msra.mxu0 %v736
    %1133 = vmatprep.subr.bf16.mxu0 %v741
    %1134 = vmatpush1.bf16.msra.mxu0 %v740
    %1135 = vmatprep.subr.bf16.mxu0 %v745
    %1136 = vmatpush1.bf16.msra.mxu0 %v744
    %1137 = vmatprep.subr.bf16.mxu0 %v749
    %1138 = vmatpush1.bf16.msra.mxu0 %v748
    %1139 = vmatprep.subr.bf16.mxu0 %v753
    %1140 = vmatpush1.bf16.msra.mxu0 %v752
    %1141 = vmatprep.subr.bf16.mxu0 %v757
    %1142 = vmatpush1.bf16.msra.mxu0 %v756
    %1143 = vmatprep.subr.bf16.mxu0 %v761
    %1144 = vmatpush1.bf16.msra.mxu0 %v760
    %1145 = vmatprep.subr.bf16.mxu0 0
    %1146 = vmatpush1.bf16.msra.mxu0 0
    %1147 = vmatprep.subr.bf16.mxu0 0
    %1148 = vmatpush1.bf16.msra.mxu0 0
    %1149 = vmatprep.subr.bf16.mxu0 0
    %1150 = vmatpush1.bf16.msra.mxu0 0
    %1151 = vmatprep.subr.bf16.mxu0 0
    %1152 = vmatpush1.bf16.msra.mxu0 0
    %1153 = vmatprep.subr.bf16.mxu0 0
    %1154 = vmatpush1.bf16.msra.mxu0 0
    %1155 = vmatprep.subr.bf16.mxu0 0
    %1156 = vmatpush1.bf16.msra.mxu0 0
    %1157 = vmatprep.subr.bf16.mxu0 0
    %1158 = vmatpush1.bf16.msra.mxu0 0
    %1159 = vmatprep.subr.bf16.mxu0 0
    %1160 = vmatpush1.bf16.msra.mxu0 0
    %1161 = vmatprep.mubr.bf16.mxu0 0
    %1162 = vmatmul.mubr.bf16.gmra.mrb[0].mxu0 %v1128
    %v1163 = vpop.f32.mrb[0].mxu0
    %v1164 = vadd.f32 0.0, %v1163
    %v1165 = vpop.f32.mrb[0].mxu0
    %v1166 = vadd.f32 0.0, %v1165
    %v1167 = vpop.f32.mrb[0].mxu0
    %v1168 = vpop.f32.mrb[0].mxu0
    %1169 = vdwg.mxu0
    %1170 = vmatprep.subr.bf16.mxu0 %v735
    %1171 = vmatpush1.bf16.msra.mxu0 %v734
    %1172 = vmatprep.subr.bf16.mxu0 %v739
    %1173 = vmatpush1.bf16.msra.mxu0 %v738
    %1174 = vmatprep.subr.bf16.mxu0 %v743
    %1175 = vmatpush1.bf16.msra.mxu0 %v742
    %1176 = vmatprep.subr.bf16.mxu0 %v747
    %1177 = vmatpush1.bf16.msra.mxu0 %v746
    %1178 = vmatprep.subr.bf16.mxu0 %v751
    %1179 = vmatpush1.bf16.msra.mxu0 %v750
    %1180 = vmatprep.subr.bf16.mxu0 %v755
    %1181 = vmatpush1.bf16.msra.mxu0 %v754
    %1182 = vmatprep.subr.bf16.mxu0 %v759
    %1183 = vmatpush1.bf16.msra.mxu0 %v758
    %1184 = vmatprep.subr.bf16.mxu0 %v763
    %1185 = vmatpush1.bf16.msra.mxu0 %v762
    %1186 = vmatprep.subr.bf16.mxu0 0
    %1187 = vmatpush1.bf16.msra.mxu0 0
    %1188 = vmatprep.subr.bf16.mxu0 0
    %1189 = vmatpush1.bf16.msra.mxu0 0
    %1190 = vmatprep.subr.bf16.mxu0 0
    %1191 = vmatpush1.bf16.msra.mxu0 0
    %1192 = vmatprep.subr.bf16.mxu0 0
    %1193 = vmatpush1.bf16.msra.mxu0 0
    %1194 = vmatprep.subr.bf16.mxu0 0
    %1195 = vmatpush1.bf16.msra.mxu0 0
    %1196 = vmatprep.subr.bf16.mxu0 0
    %1197 = vmatpush1.bf16.msra.mxu0 0
    %1198 = vmatprep.subr.bf16.mxu0 0
    %1199 = vmatpush1.bf16.msra.mxu0 0
    %1200 = vmatprep.subr.bf16.mxu0 0
    %1201 = vmatpush1.bf16.msra.mxu0 0
    %1202 = vmatprep.mubr.bf16.mxu0 0
    %1203 = vmatmul.mubr.bf16.gmra.mrb[0].mxu0 %v1128
    %v1204 = vpop.f32.mrb[0].mxu0
    %v1205 = vadd.f32 0.0, %v1204
    %v1206 = vpop.f32.mrb[0].mxu0
    %v1207 = vadd.f32 0.0, %v1206
    %v1208 = vpop.f32.mrb[0].mxu0
    %v1209 = vpop.f32.mrb[0].mxu0
    %1210 = vdwg.mxu0
    %v1211 = vadd.f32 %v507, %v1164
    %v1212 = vadd.f32 %v509, %v1166
    %v1213 = vadd.f32 %v580, %v1205
    %v1214 = vadd.f32 %v582, %v1207
    %v1215 = vxor.u32 %v1211, 2147483648
    %v1216 = vmul.f32 %v1215, 1.442695
    %v1217 = vpow.pop %v1216
    %v1218 = vadd.f32 %v1217, 1.0
    %v1219 = vrcp.pop %v1218
    %v1220 = vmul.f32 1.0, %v1219
    %v1221 = vxor.u32 %v1212, 2147483648
    %v1222 = vmul.f32 %v1221, 1.442695
    %v1223 = vpow.pop %v1222
    %v1224 = vadd.f32 %v1223, 1.0
    %v1225 = vrcp.pop %v1224
    %v1226 = vmul.f32 1.0, %v1225
    %v1227 = vtanh.pop %v1213
    %v1228 = vxor.u32 %v1214, 2147483648
    %v1229 = vmul.f32 %v1228, 1.442695
    %v1230 = vpow.pop %v1229
    %v1231 = vadd.f32 %v1230, 1.0
    %v1232 = vrcp.pop %v1231
    %v1233 = vmul.f32 1.0, %v1232
    %v1234 = vmul.f32 %v1226, %v1125
    %v1235 = vmul.f32 %v1220, %v1227
    %v1236 = vadd.f32 %v1234, %v1235
    %v1237 = vtanh.pop %v1236
    %v1238 = vmul.f32 %v1233, %v1237
    %v1239 = vpack.c.bf16 %v1238, %v1238
    %1240 = vmatprep.subr.bf16.mxu0 %v733
    %1241 = vmatpush1.bf16.msra.mxu0 %v732
    %1242 = vmatprep.subr.bf16.mxu0 %v737
    %1243 = vmatpush1.bf16.msra.mxu0 %v736
    %1244 = vmatprep.subr.bf16.mxu0 %v741
    %1245 = vmatpush1.bf16.msra.mxu0 %v740
    %1246 = vmatprep.subr.bf16.mxu0 %v745
    %1247 = vmatpush1.bf16.msra.mxu0 %v744
    %1248 = vmatprep.subr.bf16.mxu0 %v749
    %1249 = vmatpush1.bf16.msra.mxu0 %v748
    %1250 = vmatprep.subr.bf16.mxu0 %v753
    %1251 = vmatpush1.bf16.msra.mxu0 %v752
    %1252 = vmatprep.subr.bf16.mxu0 %v757
    %1253 = vmatpush1.bf16.msra.mxu0 %v756
    %1254 = vmatprep.subr.bf16.mxu0 %v761
    %1255 = vmatpush1.bf16.msra.mxu0 %v760
    %1256 = vmatprep.subr.bf16.mxu0 0
    %1257 = vmatpush1.bf16.msra.mxu0 0
    %1258 = vmatprep.subr.bf16.mxu0 0
    %1259 = vmatpush1.bf16.msra.mxu0 0
    %1260 = vmatprep.subr.bf16.mxu0 0
    %1261 = vmatpush1.bf16.msra.mxu0 0
    %1262 = vmatprep.subr.bf16.mxu0 0
    %1263 = vmatpush1.bf16.msra.mxu0 0
    %1264 = vmatprep.subr.bf16.mxu0 0
    %1265 = vmatpush1.bf16.msra.mxu0 0
    %1266 = vmatprep.subr.bf16.mxu0 0
    %1267 = vmatpush1.bf16.msra.mxu0 0
    %1268 = vmatprep.subr.bf16.mxu0 0
    %1269 = vmatpush1.bf16.msra.mxu0 0
    %1270 = vmatprep.subr.bf16.mxu0 0
    %1271 = vmatpush1.bf16.msra.mxu0 0
    %1272 = vmatprep.mubr.bf16.mxu0 0
    %1273 = vmatmul.mubr.bf16.gmra.mrb[0].mxu0 %v1239
    %v1274 = vpop.f32.mrb[0].mxu0
    %v1275 = vadd.f32 0.0, %v1274
    %v1276 = vpop.f32.mrb[0].mxu0
    %v1277 = vadd.f32 0.0, %v1276
    %v1278 = vpop.f32.mrb[0].mxu0
    %v1279 = vpop.f32.mrb[0].mxu0
    %1280 = vdwg.mxu0
    %1281 = vmatprep.subr.bf16.mxu0 %v735
    %1282 = vmatpush1.bf16.msra.mxu0 %v734
    %1283 = vmatprep.subr.bf16.mxu0 %v739
    %1284 = vmatpush1.bf16.msra.mxu0 %v738
    %1285 = vmatprep.subr.bf16.mxu0 %v743
    %1286 = vmatpush1.bf16.msra.mxu0 %v742
    %1287 = vmatprep.subr.bf16.mxu0 %v747
    %1288 = vmatpush1.bf16.msra.mxu0 %v746
    %1289 = vmatprep.subr.bf16.mxu0 %v751
    %1290 = vmatpush1.bf16.msra.mxu0 %v750
    %1291 = vmatprep.subr.bf16.mxu0 %v755
    %1292 = vmatpush1.bf16.msra.mxu0 %v754
    %1293 = vmatprep.subr.bf16.mxu0 %v759
    %1294 = vmatpush1.bf16.msra.mxu0 %v758
    %1295 = vmatprep.subr.bf16.mxu0 %v763
    %1296 = vmatpush1.bf16.msra.mxu0 %v762
    %1297 = vmatprep.subr.bf16.mxu0 0
    %1298 = vmatpush1.bf16.msra.mxu0 0
    %1299 = vmatprep.subr.bf16.mxu0 0
    %1300 = vmatpush1.bf16.msra.mxu0 0
    %1301 = vmatprep.subr.bf16.mxu0 0
    %1302 = vmatpush1.bf16.msra.mxu0 0
    %1303 = vmatprep.subr.bf16.mxu0 0
    %1304 = vmatpush1.bf16.msra.mxu0 0
    %1305 = vmatprep.subr.bf16.mxu0 0
    %1306 = vmatpush1.bf16.msra.mxu0 0
    %1307 = vmatprep.subr.bf16.mxu0 0
    %1308 = vmatpush1.bf16.msra.mxu0 0
    %1309 = vmatprep.subr.bf16.mxu0 0
    %1310 = vmatpush1.bf16.msra.mxu0 0
    %1311 = vmatprep.subr.bf16.mxu0 0
    %1312 = vmatpush1.bf16.msra.mxu0 0
    %1313 = vmatprep.mubr.bf16.mxu0 0
    %1314 = vmatmul.mubr.bf16.gmra.mrb[0].mxu0 %v1239
    %v1315 = vpop.f32.mrb[0].mxu0
    %v1316 = vadd.f32 0.0, %v1315
    %v1317 = vpop.f32.mrb[0].mxu0
    %v1318 = vadd.f32 0.0, %v1317
    %v1319 = vpop.f32.mrb[0].mxu0
    %v1320 = vpop.f32.mrb[0].mxu0
    %1321 = vdwg.mxu0
    %v1322 = vadd.f32 %v513, %v1275
    %v1323 = vadd.f32 %v515, %v1277
    %v1324 = vadd.f32 %v586, %v1316
    %v1325 = vadd.f32 %v588, %v1318
    %v1326 = vxor.u32 %v1322, 2147483648
    %v1327 = vmul.f32 %v1326, 1.442695
    %v1328 = vpow.pop %v1327
    %v1329 = vadd.f32 %v1328, 1.0
    %v1330 = vrcp.pop %v1329
    %v1331 = vmul.f32 1.0, %v1330
    %v1332 = vxor.u32 %v1323, 2147483648
    %v1333 = vmul.f32 %v1332, 1.442695
    %v1334 = vpow.pop %v1333
    %v1335 = vadd.f32 %v1334, 1.0
    %v1336 = vrcp.pop %v1335
    %v1337 = vmul.f32 1.0, %v1336
    %v1338 = vtanh.pop %v1324
    %v1339 = vxor.u32 %v1325, 2147483648
    %v1340 = vmul.f32 %v1339, 1.442695
    %v1341 = vpow.pop %v1340
    %v1342 = vadd.f32 %v1341, 1.0
    %v1343 = vrcp.pop %v1342
    %v1344 = vmul.f32 1.0, %v1343
    %v1345 = vmul.f32 %v1337, %v1236
    %v1346 = vmul.f32 %v1331, %v1338
    %v1347 = vadd.f32 %v1345, %v1346
    %v1348 = vtanh.pop %v1347
    %v1349 = vmul.f32 %v1344, %v1348
    %v1350 = vpack.c.bf16 %v1349, %v1349
    %1351 = vmatprep.subr.bf16.mxu0 %v733
    %1352 = vmatpush1.bf16.msra.mxu0 %v732
    %1353 = vmatprep.subr.bf16.mxu0 %v737
    %1354 = vmatpush1.bf16.msra.mxu0 %v736
    %1355 = vmatprep.subr.bf16.mxu0 %v741
    %1356 = vmatpush1.bf16.msra.mxu0 %v740
    %1357 = vmatprep.subr.bf16.mxu0 %v745
    %1358 = vmatpush1.bf16.msra.mxu0 %v744
    %1359 = vmatprep.subr.bf16.mxu0 %v749
    %1360 = vmatpush1.bf16.msra.mxu0 %v748
    %1361 = vmatprep.subr.bf16.mxu0 %v753
    %1362 = vmatpush1.bf16.msra.mxu0 %v752
    %1363 = vmatprep.subr.bf16.mxu0 %v757
    %1364 = vmatpush1.bf16.msra.mxu0 %v756
    %1365 = vmatprep.subr.bf16.mxu0 %v761
    %1366 = vmatpush1.bf16.msra.mxu0 %v760
    %1367 = vmatprep.subr.bf16.mxu0 0
    %1368 = vmatpush1.bf16.msra.mxu0 0
    %1369 = vmatprep.subr.bf16.mxu0 0
    %1370 = vmatpush1.bf16.msra.mxu0 0
    %1371 = vmatprep.subr.bf16.mxu0 0
    %1372 = vmatpush1.bf16.msra.mxu0 0
    %1373 = vmatprep.subr.bf16.mxu0 0
    %1374 = vmatpush1.bf16.msra.mxu0 0
    %1375 = vmatprep.subr.bf16.mxu0 0
    %1376 = vmatpush1.bf16.msra.mxu0 0
    %1377 = vmatprep.subr.bf16.mxu0 0
    %1378 = vmatpush1.bf16.msra.mxu0 0
    %1379 = vmatprep.subr.bf16.mxu0 0
    %1380 = vmatpush1.bf16.msra.mxu0 0
    %1381 = vmatprep.subr.bf16.mxu0 0
    %1382 = vmatpush1.bf16.msra.mxu0 0
    %1383 = vmatprep.mubr.bf16.mxu0 0
    %1384 = vmatmul.mubr.bf16.gmra.mrb[0].mxu0 %v1350
    %v1385 = vpop.f32.mrb[0].mxu0
    %v1386 = vadd.f32 0.0, %v1385
    %v1387 = vpop.f32.mrb[0].mxu0
    %v1388 = vadd.f32 0.0, %v1387
    %v1389 = vpop.f32.mrb[0].mxu0
    %v1390 = vpop.f32.mrb[0].mxu0
    %1391 = vdwg.mxu0
    %1392 = vmatprep.subr.bf16.mxu0 %v735
    %1393 = vmatpush1.bf16.msra.mxu0 %v734
    %1394 = vmatprep.subr.bf16.mxu0 %v739
    %1395 = vmatpush1.bf16.msra.mxu0 %v738
    %1396 = vmatprep.subr.bf16.mxu0 %v743
    %1397 = vmatpush1.bf16.msra.mxu0 %v742
    %1398 = vmatprep.subr.bf16.mxu0 %v747
    %1399 = vmatpush1.bf16.msra.mxu0 %v746
    %1400 = vmatprep.subr.bf16.mxu0 %v751
    %1401 = vmatpush1.bf16.msra.mxu0 %v750
    %1402 = vmatprep.subr.bf16.mxu0 %v755
    %1403 = vmatpush1.bf16.msra.mxu0 %v754
    %1404 = vmatprep.subr.bf16.mxu0 %v759
    %1405 = vmatpush1.bf16.msra.mxu0 %v758
    %1406 = vmatprep.subr.bf16.mxu0 %v763
    %1407 = vmatpush1.bf16.msra.mxu0 %v762
    %1408 = vmatprep.subr.bf16.mxu0 0
    %1409 = vmatpush1.bf16.msra.mxu0 0
    %1410 = vmatprep.subr.bf16.mxu0 0
    %1411 = vmatpush1.bf16.msra.mxu0 0
    %1412 = vmatprep.subr.bf16.mxu0 0
    %1413 = vmatpush1.bf16.msra.mxu0 0
    %1414 = vmatprep.subr.bf16.mxu0 0
    %1415 = vmatpush1.bf16.msra.mxu0 0
    %1416 = vmatprep.subr.bf16.mxu0 0
    %1417 = vmatpush1.bf16.msra.mxu0 0
    %1418 = vmatprep.subr.bf16.mxu0 0
    %1419 = vmatpush1.bf16.msra.mxu0 0
    %1420 = vmatprep.subr.bf16.mxu0 0
    %1421 = vmatpush1.bf16.msra.mxu0 0
    %1422 = vmatprep.subr.bf16.mxu0 0
    %1423 = vmatpush1.bf16.msra.mxu0 0
    %1424 = vmatprep.mubr.bf16.mxu0 0
    %1425 = vmatmul.mubr.bf16.gmra.mrb[0].mxu0 %v1350
    %v1426 = vpop.f32.mrb[0].mxu0
    %v1427 = vadd.f32 0.0, %v1426
    %v1428 = vpop.f32.mrb[0].mxu0
    %v1429 = vadd.f32 0.0, %v1428
    %v1430 = vpop.f32.mrb[0].mxu0
    %v1431 = vpop.f32.mrb[0].mxu0
    %1432 = vdwg.mxu0
    %v1433 = vadd.f32 %v517, %v1386
    %v1434 = vadd.f32 %v519, %v1388
    %v1435 = vadd.f32 %v590, %v1427
    %v1436 = vadd.f32 %v592, %v1429
    %v1437 = vxor.u32 %v1433, 2147483648
    %v1438 = vmul.f32 %v1437, 1.442695
    %v1439 = vpow.pop %v1438
    %v1440 = vadd.f32 %v1439, 1.0
    %v1441 = vrcp.pop %v1440
    %v1442 = vmul.f32 1.0, %v1441
    %v1443 = vxor.u32 %v1434, 2147483648
    %v1444 = vmul.f32 %v1443, 1.442695
    %v1445 = vpow.pop %v1444
    %v1446 = vadd.f32 %v1445, 1.0
    %v1447 = vrcp.pop %v1446
    %v1448 = vmul.f32 1.0, %v1447
    %v1449 = vtanh.pop %v1435
    %v1450 = vxor.u32 %v1436, 2147483648
    %v1451 = vmul.f32 %v1450, 1.442695
    %v1452 = vpow.pop %v1451
    %v1453 = vadd.f32 %v1452, 1.0
    %v1454 = vrcp.pop %v1453
    %v1455 = vmul.f32 1.0, %v1454
    %v1456 = vmul.f32 %v1448, %v1347
    %v1457 = vmul.f32 %v1442, %v1449
    %v1458 = vadd.f32 %v1456, %v1457
    %v1459 = vtanh.pop %v1458
    %v1460 = vmul.f32 %v1455, %v1459
    %v1461 = vpack.c.bf16 %v1460, %v1460
    %1462 = vmatprep.subr.bf16.mxu0 %v733
    %1463 = vmatpush1.bf16.msra.mxu0 %v732
    %1464 = vmatprep.subr.bf16.mxu0 %v737
    %1465 = vmatpush1.bf16.msra.mxu0 %v736
    %1466 = vmatprep.subr.bf16.mxu0 %v741
    %1467 = vmatpush1.bf16.msra.mxu0 %v740
    %1468 = vmatprep.subr.bf16.mxu0 %v745
    %1469 = vmatpush1.bf16.msra.mxu0 %v744
    %1470 = vmatprep.subr.bf16.mxu0 %v749
    %1471 = vmatpush1.bf16.msra.mxu0 %v748
    %1472 = vmatprep.subr.bf16.mxu0 %v753
    %1473 = vmatpush1.bf16.msra.mxu0 %v752
    %1474 = vmatprep.subr.bf16.mxu0 %v757
    %1475 = vmatpush1.bf16.msra.mxu0 %v756
    %1476 = vmatprep.subr.bf16.mxu0 %v761
    %1477 = vmatpush1.bf16.msra.mxu0 %v760
    %1478 = vmatprep.subr.bf16.mxu0 0
    %1479 = vmatpush1.bf16.msra.mxu0 0
    %1480 = vmatprep.subr.bf16.mxu0 0
    %1481 = vmatpush1.bf16.msra.mxu0 0
    %1482 = vmatprep.subr.bf16.mxu0 0
    %1483 = vmatpush1.bf16.msra.mxu0 0
    %1484 = vmatprep.subr.bf16.mxu0 0
    %1485 = vmatpush1.bf16.msra.mxu0 0
    %1486 = vmatprep.subr.bf16.mxu0 0
    %1487 = vmatpush1.bf16.msra.mxu0 0
    %1488 = vmatprep.subr.bf16.mxu0 0
    %1489 = vmatpush1.bf16.msra.mxu0 0
    %1490 = vmatprep.subr.bf16.mxu0 0
    %1491 = vmatpush1.bf16.msra.mxu0 0
    %1492 = vmatprep.subr.bf16.mxu0 0
    %1493 = vmatpush1.bf16.msra.mxu0 0
    %1494 = vmatprep.mubr.bf16.mxu0 0
    %1495 = vmatmul.mubr.bf16.gmra.mrb[0].mxu0 %v1461
    %v1496 = vpop.f32.mrb[0].mxu0
    %v1497 = vadd.f32 0.0, %v1496
    %v1498 = vpop.f32.mrb[0].mxu0
    %v1499 = vadd.f32 0.0, %v1498
    %v1500 = vpop.f32.mrb[0].mxu0
    %v1501 = vpop.f32.mrb[0].mxu0
    %1502 = vdwg.mxu0
    %1503 = vmatprep.subr.bf16.mxu0 %v735
    %1504 = vmatpush1.bf16.msra.mxu0 %v734
    %1505 = vmatprep.subr.bf16.mxu0 %v739
    %1506 = vmatpush1.bf16.msra.mxu0 %v738
    %1507 = vmatprep.subr.bf16.mxu0 %v743
    %1508 = vmatpush1.bf16.msra.mxu0 %v742
    %1509 = vmatprep.subr.bf16.mxu0 %v747
    %1510 = vmatpush1.bf16.msra.mxu0 %v746
    %1511 = vmatprep.subr.bf16.mxu0 %v751
    %1512 = vmatpush1.bf16.msra.mxu0 %v750
    %1513 = vmatprep.subr.bf16.mxu0 %v755
    %1514 = vmatpush1.bf16.msra.mxu0 %v754
    %1515 = vmatprep.subr.bf16.mxu0 %v759
    %1516 = vmatpush1.bf16.msra.mxu0 %v758
    %1517 = vmatprep.subr.bf16.mxu0 %v763
    %1518 = vmatpush1.bf16.msra.mxu0 %v762
    %1519 = vmatprep.subr.bf16.mxu0 0
    %1520 = vmatpush1.bf16.msra.mxu0 0
    %1521 = vmatprep.subr.bf16.mxu0 0
    %1522 = vmatpush1.bf16.msra.mxu0 0
    %1523 = vmatprep.subr.bf16.mxu0 0
    %1524 = vmatpush1.bf16.msra.mxu0 0
    %1525 = vmatprep.subr.bf16.mxu0 0
    %1526 = vmatpush1.bf16.msra.mxu0 0
    %1527 = vmatprep.subr.bf16.mxu0 0
    %1528 = vmatpush1.bf16.msra.mxu0 0
    %1529 = vmatprep.subr.bf16.mxu0 0
    %1530 = vmatpush1.bf16.msra.mxu0 0
    %1531 = vmatprep.subr.bf16.mxu0 0
    %1532 = vmatpush1.bf16.msra.mxu0 0
    %1533 = vmatprep.subr.bf16.mxu0 0
    %1534 = vmatpush1.bf16.msra.mxu0 0
    %1535 = vmatprep.mubr.bf16.mxu0 0
    %1536 = vmatmul.mubr.bf16.gmra.mrb[0].mxu0 %v1461
    %v1537 = vpop.f32.mrb[0].mxu0
    %v1538 = vadd.f32 0.0, %v1537
    %v1539 = vpop.f32.mrb[0].mxu0
    %v1540 = vadd.f32 0.0, %v1539
    %v1541 = vpop.f32.mrb[0].mxu0
    %v1542 = vpop.f32.mrb[0].mxu0
    %1543 = vdwg.mxu0
    %v1544 = vadd.f32 %v523, %v1497
    %v1545 = vadd.f32 %v525, %v1499
    %v1546 = vadd.f32 %v596, %v1538
    %v1547 = vadd.f32 %v598, %v1540
    %v1548 = vxor.u32 %v1544, 2147483648
    %v1549 = vmul.f32 %v1548, 1.442695
    %v1550 = vpow.pop %v1549
    %v1551 = vadd.f32 %v1550, 1.0
    %v1552 = vrcp.pop %v1551
    %v1553 = vmul.f32 1.0, %v1552
    %v1554 = vxor.u32 %v1545, 2147483648
    %v1555 = vmul.f32 %v1554, 1.442695
    %v1556 = vpow.pop %v1555
    %v1557 = vadd.f32 %v1556, 1.0
    %v1558 = vrcp.pop %v1557
    %v1559 = vmul.f32 1.0, %v1558
    %v1560 = vtanh.pop %v1546
    %v1561 = vxor.u32 %v1547, 2147483648
    %v1562 = vmul.f32 %v1561, 1.442695
    %v1563 = vpow.pop %v1562
    %v1564 = vadd.f32 %v1563, 1.0
    %v1565 = vrcp.pop %v1564
    %v1566 = vmul.f32 1.0, %v1565
    %v1567 = vmul.f32 %v1559, %v1458
    %v1568 = vmul.f32 %v1553, %v1560
    %v1569 = vadd.f32 %v1567, %v1568
    %v1570 = vtanh.pop %v1569
    %v1571 = vmul.f32 %v1566, %v1570
    %v1572 = vpack.c.bf16 %v1571, %v1571
    %1573 = vmatprep.subr.bf16.mxu0 %v733
    %1574 = vmatpush1.bf16.msra.mxu0 %v732
    %1575 = vmatprep.subr.bf16.mxu0 %v737
    %1576 = vmatpush1.bf16.msra.mxu0 %v736
    %1577 = vmatprep.subr.bf16.mxu0 %v741
    %1578 = vmatpush1.bf16.msra.mxu0 %v740
    %1579 = vmatprep.subr.bf16.mxu0 %v745
    %1580 = vmatpush1.bf16.msra.mxu0 %v744
    %1581 = vmatprep.subr.bf16.mxu0 %v749
    %1582 = vmatpush1.bf16.msra.mxu0 %v748
    %1583 = vmatprep.subr.bf16.mxu0 %v753
    %1584 = vmatpush1.bf16.msra.mxu0 %v752
    %1585 = vmatprep.subr.bf16.mxu0 %v757
    %1586 = vmatpush1.bf16.msra.mxu0 %v756
    %1587 = vmatprep.subr.bf16.mxu0 %v761
    %1588 = vmatpush1.bf16.msra.mxu0 %v760
    %1589 = vmatprep.subr.bf16.mxu0 0
    %1590 = vmatpush1.bf16.msra.mxu0 0
    %1591 = vmatprep.subr.bf16.mxu0 0
    %1592 = vmatpush1.bf16.msra.mxu0 0
    %1593 = vmatprep.subr.bf16.mxu0 0
    %1594 = vmatpush1.bf16.msra.mxu0 0
    %1595 = vmatprep.subr.bf16.mxu0 0
    %1596 = vmatpush1.bf16.msra.mxu0 0
    %1597 = vmatprep.subr.bf16.mxu0 0
    %1598 = vmatpush1.bf16.msra.mxu0 0
    %1599 = vmatprep.subr.bf16.mxu0 0
    %1600 = vmatpush1.bf16.msra.mxu0 0
    %1601 = vmatprep.subr.bf16.mxu0 0
    %1602 = vmatpush1.bf16.msra.mxu0 0
    %1603 = vmatprep.subr.bf16.mxu0 0
    %1604 = vmatpush1.bf16.msra.mxu0 0
    %1605 = vmatprep.mubr.bf16.mxu0 0
    %1606 = vmatmul.mubr.bf16.gmra.mrb[0].mxu0 %v1572
    %v1607 = vpop.f32.mrb[0].mxu0
    %v1608 = vadd.f32 0.0, %v1607
    %v1609 = vpop.f32.mrb[0].mxu0
    %v1610 = vadd.f32 0.0, %v1609
    %v1611 = vpop.f32.mrb[0].mxu0
    %v1612 = vpop.f32.mrb[0].mxu0
    %1613 = vdwg.mxu0
    %1614 = vmatprep.subr.bf16.mxu0 %v735
    %1615 = vmatpush1.bf16.msra.mxu0 %v734
    %1616 = vmatprep.subr.bf16.mxu0 %v739
    %1617 = vmatpush1.bf16.msra.mxu0 %v738
    %1618 = vmatprep.subr.bf16.mxu0 %v743
    %1619 = vmatpush1.bf16.msra.mxu0 %v742
    %1620 = vmatprep.subr.bf16.mxu0 %v747
    %1621 = vmatpush1.bf16.msra.mxu0 %v746
    %1622 = vmatprep.subr.bf16.mxu0 %v751
    %1623 = vmatpush1.bf16.msra.mxu0 %v750
    %1624 = vmatprep.subr.bf16.mxu0 %v755
    %1625 = vmatpush1.bf16.msra.mxu0 %v754
    %1626 = vmatprep.subr.bf16.mxu0 %v759
    %1627 = vmatpush1.bf16.msra.mxu0 %v758
    %1628 = vmatprep.subr.bf16.mxu0 %v763
    %1629 = vmatpush1.bf16.msra.mxu0 %v762
    %1630 = vmatprep.subr.bf16.mxu0 0
    %1631 = vmatpush1.bf16.msra.mxu0 0
    %1632 = vmatprep.subr.bf16.mxu0 0
    %1633 = vmatpush1.bf16.msra.mxu0 0
    %1634 = vmatprep.subr.bf16.mxu0 0
    %1635 = vmatpush1.bf16.msra.mxu0 0
    %1636 = vmatprep.subr.bf16.mxu0 0
    %1637 = vmatpush1.bf16.msra.mxu0 0
    %1638 = vmatprep.subr.bf16.mxu0 0
    %1639 = vmatpush1.bf16.msra.mxu0 0
    %1640 = vmatprep.subr.bf16.mxu0 0
    %1641 = vmatpush1.bf16.msra.mxu0 0
    %1642 = vmatprep.subr.bf16.mxu0 0
    %1643 = vmatpush1.bf16.msra.mxu0 0
    %1644 = vmatprep.subr.bf16.mxu0 0
    %1645 = vmatpush1.bf16.msra.mxu0 0
    %1646 = vmatprep.mubr.bf16.mxu0 0
    %1647 = vmatmul.mubr.bf16.gmra.mrb[0].mxu0 %v1572
    %v1648 = vpop.f32.mrb[0].mxu0
    %v1649 = vadd.f32 0.0, %v1648
    %v1650 = vpop.f32.mrb[0].mxu0
    %v1651 = vadd.f32 0.0, %v1650
    %v1652 = vpop.f32.mrb[0].mxu0
    %v1653 = vpop.f32.mrb[0].mxu0
    %1654 = vdwg.mxu0
    %v1655 = vadd.f32 %v527, %v1608
    %v1656 = vadd.f32 %v529, %v1610
    %v1657 = vadd.f32 %v600, %v1649
    %v1658 = vadd.f32 %v602, %v1651
    %v1659 = vxor.u32 %v1655, 2147483648
    %v1660 = vmul.f32 %v1659, 1.442695
    %v1661 = vpow.pop %v1660
    %v1662 = vadd.f32 %v1661, 1.0
    %v1663 = vrcp.pop %v1662
    %v1664 = vmul.f32 1.0, %v1663
    %v1665 = vxor.u32 %v1656, 2147483648
    %v1666 = vmul.f32 %v1665, 1.442695
    %v1667 = vpow.pop %v1666
    %v1668 = vadd.f32 %v1667, 1.0
    %v1669 = vrcp.pop %v1668
    %v1670 = vmul.f32 1.0, %v1669
    %v1671 = vtanh.pop %v1657
    %v1672 = vxor.u32 %v1658, 2147483648
    %v1673 = vmul.f32 %v1672, 1.442695
    %v1674 = vpow.pop %v1673
    %v1675 = vadd.f32 %v1674, 1.0
    %v1676 = vrcp.pop %v1675
    %v1677 = vmul.f32 1.0, %v1676
    %v1678 = vmul.f32 %v1670, %v1569
    %v1679 = vmul.f32 %v1664, %v1671
    %v1680 = vadd.f32 %v1678, %v1679
    %v1681 = vtanh.pop %v1680
    %v1682 = vmul.f32 %v1677, %v1681
    %v1683 = vmul.f32 %v1682, %v1682
    %vm1684 = vcmask 1041408
    %v1685 = vsel %vm1684, %v1683, 0.0
    %1686 = vadd.xlane.f32.xlu0 %v1685
    %v1687 = vpop.xlane.xlu0 %1686
    %v1689 = vrot.slane %v1682, 2
    %v1691 = vmul.f32 %v1682, %v1689
    %v1692 = vsel %vm1684, %v1691, 0.0
    %1693 = vadd.xlane.f32.xlu0 %v1692
    %v1694 = vpop.xlane.xlu0 %1693
    %vm1695 = vcmask 1043458
    %v1696 = vsel %vm1695, %v1683, 0.0
    %1697 = vadd.xlane.f32.xlu0 %v1696
    %v1698 = vpop.xlane.xlu0 %1697
    %v1700 = vrot.slane %v1698, 2
    %v1702 = vmul.f32 %v1687, %v1700
    %v1703 = vmax.f32 %v1702, 0.01
    %v1704 = vrsqrt.pop %v1703
    %v1705 = vmul.f32 %v1694, %v1704
    %v1706 = vrot.slane %v1682, 4
    %v1708 = vmul.f32 %v1682, %v1706
    %v1709 = vsel %vm1684, %v1708, 0.0
    %1710 = vadd.xlane.f32.xlu0 %v1709
    %v1711 = vpop.xlane.xlu0 %1710
    %vm1712 = vcmask 1045508
    %v1713 = vsel %vm1712, %v1683, 0.0
    %1714 = vadd.xlane.f32.xlu0 %v1713
    %v1715 = vpop.xlane.xlu0 %1714
    %v1717 = vrot.slane %v1715, 4
    %v1719 = vmul.f32 %v1687, %v1717
    %v1720 = vmax.f32 %v1719, 0.01
    %v1721 = vrsqrt.pop %v1720
    %v1722 = vmul.f32 %v1711, %v1721
    %v1723 = vrot.slane %v1682, 6
    %v1725 = vmul.f32 %v1682, %v1723
    %v1726 = vsel %vm1684, %v1725, 0.0
    %1727 = vadd.xlane.f32.xlu0 %v1726
    %v1728 = vpop.xlane.xlu0 %1727
    %vm1729 = vcmask 1047558
    %v1730 = vsel %vm1729, %v1683, 0.0
    %1731 = vadd.xlane.f32.xlu0 %v1730
    %v1732 = vpop.xlane.xlu0 %1731
    %v1734 = vrot.slane %v1732, 6
    %v1736 = vmul.f32 %v1687, %v1734
    %v1737 = vmax.f32 %v1736, 0.01
    %v1738 = vrsqrt.pop %v1737
    %v1739 = vmul.f32 %v1728, %v1738
    %v1740 = vmax.f32 %v1705, %v1722
    %v1741 = vmax.f32 %v1740, %v1739
    %v1742 = vmin.f32 %v1705, %v1722
    %v1743 = vmin.f32 %v1742, %v1739
    %v1744 = vadd.f32 %v1705, %v1722
    %v1745 = vadd.f32 %v1744, %v1739
    %v1746 = vsub.f32 %v1745, %v1741
    %v1747 = vsub.f32 %v1746, %v1743
    %v1748 = vsub.f32 0.4, %v1741
    %v1749 = vadd.f32 %v1748, %v1747
    %v1750 = vmax.f32 %v1749, 0.0
    %vm1751 = vcmask 1024
    %v1752 = vsel %vm1751, %v1750, 0.0
    %v1753 = vrot.slane %v1752, 4
    %v1754 = vadd.f32 %v1752, %v1753
    %v1755 = vrot.slane %v1754, 2
    %v1756 = vadd.f32 %v1754, %v1755
    %v1757 = vrot.slane %v1756, 1
    %v1758 = vadd.f32 %v1756, %v1757
    %1760 = vrot.lane.b32.xlu0 %v1722, 1
    %v1761 = vpop.permute.xlu0 %1760
    %1764 = vrot.lane.b32.xlu0 %v1739, 2
    %v1765 = vpop.permute.xlu0 %1764
    %1768 = vrot.lane.b32.xlu0 %v1758, 3
    %v1769 = vpop.permute.xlu0 %1768
    %vm1771 = vcmask 7168
    %v1772 = vsel %vm1771, %v1705, %v1761
    %vm1773 = vcmask 15360
    %v1774 = vsel %vm1773, %v1772, %v1765
    %vm1775 = vcmask 23552
    %v1776 = vsel %vm1775, %v1774, %v1769
    %vm1777 = vcmask 31744
    %v1778 = vsel %vm1777, %v1776, 0.0
    %v1779 = vsel %vm1684, %v1778, 0.0
    %1780 = vst [vmem:[%s5] sm:$0xff] %v1779
    // Predicated region
    $region30: #{rhyme_forward.1} parent=1 // pred_check
      _
    $region31: #{rhyme_forward.1} parent=1 // pred_check_branch
      %1782 = sbr.rel (0) target = $region33
    $region32: #{rhyme_forward.1} parent=1 // pred_region
      _
    $region33: #{rhyme_forward.1} parent=1 // pred_fallthru
      _
    // Predicated region
    $region34: #{rhyme_forward.1} parent=1 // pred_check
      _
    $region35: #{rhyme_forward.1} parent=1 // pred_check_branch
      %1784 = sbr.rel (0) target = $region37
    $region36: #{rhyme_forward.1} parent=1 // pred_region
      _
    $region37: #{rhyme_forward.1} parent=1 // pred_fallthru
      _
    %1785 = vsyncpa [#allocation3], 1
    %1786 = vsyncpa [#allocation5], 1

</llo_original>
